<compile_context>
chip_gen: v7x
topology: tpu7x:2x2x1
jax: 0.10.0
libtpu: 0.0.40
codegen_flags: <defaults>
</compile_context>

<pallas_src>
import functools
import math

import jax
import jax.numpy as jnp
from jax import lax
from jax.experimental import pallas as pl
from jax.experimental.pallas import tpu as pltpu


# ----------------------------------------------------------------------------
# Fused kernel: projections + per-head attention for one batch tile
# ----------------------------------------------------------------------------
def _coattn_fused_kernel(xq_ref, xk_ref, xv_ref,
                         wq_ref, wk_ref, wv_ref,
                         bq_ref, bk_ref, bv_ref,
                         o_ref, *, num_heads, d_k, seq_len, batch_per_block):
    f32 = jnp.float32
    bf16 = jnp.bfloat16
    scale = 1.0 / math.sqrt(d_k)

    def project(x_ref, w_ref, b_ref):
        # bf16 x bf16 MXU matmul with f32 accumulation; bias add in f32.
        return (jnp.dot(x_ref[...], w_ref[...], preferred_element_type=f32)
                + b_ref[...].astype(f32))

    q = project(xq_ref, wq_ref, bq_ref)      # (batch_per_block*seq_len, d_model) f32
    k = project(xk_ref, wk_ref, bk_ref)
    v = project(xv_ref, wv_ref, bv_ref)

    # Per (batch-row-block, head): static row/column slices keep everything in VMEM,
    # no (B, H, S, d_k) materialization anywhere.
    for j in range(batch_per_block):
        r0 = j * seq_len
        for h in range(num_heads):
            c0 = h * d_k
            qh = q[r0:r0 + seq_len, c0:c0 + d_k].astype(bf16)
            kh = k[r0:r0 + seq_len, c0:c0 + d_k].astype(bf16)
            vh = v[r0:r0 + seq_len, c0:c0 + d_k].astype(bf16)

            # scores = qh @ kh^T, transpose folded into the contraction dims.
            s = lax.dot_general(qh, kh, (((1,), (1,)), ((), ())),
                                preferred_element_type=f32) * scale
            s = s - jnp.max(s, axis=-1, keepdims=True)        # f32 softmax
            p = jnp.exp(s)
            p = p * pl.reciprocal(jnp.sum(p, axis=-1, keepdims=True), approx=True)

            out_h = jnp.dot(p.astype(bf16), vh, preferred_element_type=f32)
            o_ref[r0:r0 + seq_len, c0:c0 + d_k] = out_h.astype(o_ref.dtype)


def _pick_batch_block(batch, seq, target_rows=512):
    """Largest divisor of `batch` keeping rows = bb*seq a multiple of 8 and <= target."""
    best = None
    for bb in range(1, batch + 1):
        if batch % bb:
            continue
        rows = bb * seq
        if rows > target_rows:
            break
        if rows % 8 == 0:
            best = bb
    if best is None:
        best = batch  # full-array block is always a legal block shape
    return best


def multihead_coattention(query, key, value, wq, wk, wv, bq, bk, bv,
                          *, num_heads, modality_num):
    """query/key/value: (B, S, d_model) f32; weights (d_model, d_model); biases (d_model,)."""
    B, S, D = query.shape
    assert D % num_heads == 0
    d_k = D // num_heads
    # The PyTorch module's final .view() silently assumes seq_len == modality_num.
    assert S == modality_num, "final view assumes seq_len == modality_num"

    bb = _pick_batch_block(B, S)
    rows = bb * S
    grid = (B // bb,)

    bf16 = jnp.bfloat16
    xq = query.reshape(B * S, D).astype(bf16)
    xk = key.reshape(B * S, D).astype(bf16)
    xv = value.reshape(B * S, D).astype(bf16)
    wq_b, wk_b, wv_b = (w.astype(bf16) for w in (wq, wk, wv))
    bq2, bk2, bv2 = (b.reshape(1, D).astype(jnp.float32) for b in (bq, bk, bv))

    x_spec = pl.BlockSpec((rows, D), lambda i: (i, 0))
    w_spec = pl.BlockSpec((D, D), lambda i: (0, 0))   # constant block -> stays resident
    b_spec = pl.BlockSpec((1, D), lambda i: (0, 0))

    out = pl.pallas_call(
        functools.partial(_coattn_fused_kernel, num_heads=num_heads, d_k=d_k,
                          seq_len=S, batch_per_block=bb),
        out_shape=jax.ShapeDtypeStruct((B * S, D), jnp.float32),
        grid=grid,
        in_specs=[x_spec, x_spec, x_spec,
                  w_spec, w_spec, w_spec,
                  b_spec, b_spec, b_spec],
        out_specs=pl.BlockSpec((rows, D), lambda i: (i, 0)),
        compiler_params=pltpu.CompilerParams(dimension_semantics=("parallel",)),
    )(xq, xk, xv, wq_b, wk_b, wv_b, bq2, bk2, bv2)

    return out.reshape(B, modality_num, num_heads * d_k)


# ----------------------------------------------------------------------------
# Module wrapper (parameters stored in f32; downcast to bf16 at call time)
# ----------------------------------------------------------------------------
class MultiHeadCoattentionPallas:
    def __init__(self, num_of_heads, d_model, modality_num, key):
        assert d_model % num_of_heads == 0
        self.d_k = d_model // num_of_heads
        self.num_of_heads = num_of_heads
        self.d_model = d_model
        self.modality_num = modality_num
        keys = jax.random.split(key, 6)
        bound = 1.0 / math.sqrt(d_model)
        # weights stored transposed to (in, out) so y = x @ W + b
        self.weights = [
            jax.random.uniform(keys[2 * i], (d_model, d_model),
                               minval=-bound, maxval=bound, dtype=jnp.float32)
            for i in range(3)
        ]
        self.biases = [
            jax.random.uniform(keys[2 * i + 1], (d_model,),
                               minval=-bound, maxval=bound, dtype=jnp.float32)
            for i in range(3)
        ]

    def __call__(self, query, key, value):
        return multihead_coattention(
            query, key, value,
            self.weights[0], self.weights[1], self.weights[2],
            self.biases[0], self.biases[1], self.biases[2],
            num_heads=self.num_of_heads, modality_num=self.modality_num)


# ----------------------------------------------------------------------------
# Pure-JAX f32 reference (for sanity checking the fused kernel)
# ----------------------------------------------------------------------------
def reference_forward(module, query, key, value):
    B = query.shape[0]
    H, d_k = module.num_of_heads, module.d_k

    def project(x, w, b):
        y = x @ w + b
        return y.reshape(B, -1, H, d_k).transpose(0, 2, 1, 3)

    q = project(query, module.weights[0], module.biases[0])
    k = project(key, module.weights[1], module.biases[1])
    v = project(value, module.weights[2], module.biases[2])
    scores = jnp.einsum("bhqd,bhkd->bhqk", q, k) / jnp.sqrt(jnp.float32(d_k))
    p = jax.nn.softmax(scores, axis=-1)
    x = jnp.einsum("bhqk,bhkd->bhqd", p, v)
    return x.transpose(0, 2, 1, 3).reshape(B, module.modality_num, H * d_k)


if __name__ == "__main__":
    # Small shapes consistent with the module: batch=2, heads=4, d_model=32,
    # modality_num = seq = 8.
    B, H, D, MOD = 2, 4, 32, 8

    root = jax.random.PRNGKey(0)
    k_param, k_q, k_k, k_v = jax.random.split(root, 4)

    module = MultiHeadCoattentionPallas(num_of_heads=H, d_model=D,
                                        modality_num=MOD, key=k_param)

    query = jax.random.normal(k_q, (B, MOD, D), dtype=jnp.float32)
    key_in = jax.random.normal(k_k, (B, MOD, D), dtype=jnp.float32)
    value = jax.random.normal(k_v, (B, MOD, D), dtype=jnp.float32)

    out = jax.block_until_ready(module(query, key_in, value))
    ref = jax.block_until_ready(reference_forward(module, query, key_in, value))

    assert out.shape == (B, MOD, H * (D // H))
    # Tolerance relaxed vs. f32 reference because the kernel uses bf16 MXU operands
    # (f32 accumulation) and an approximate softmax reciprocal.
    assert jnp.allclose(out, ref, atol=3e-2, rtol=3e-2), (
        f"max abs diff = {jnp.max(jnp.abs(out - ref))}")

    print("KERNEL_OK")
</pallas_src>

<mosaic_0001>
module attributes {stable_mosaic.version = 11 : i64} {
  func.func @_coattn_fused_kernel(%arg0: i32, %arg1: memref<16x32xbf16, #tpu.memory_space<vmem>>, %arg2: memref<16x32xbf16, #tpu.memory_space<vmem>>, %arg3: memref<16x32xbf16, #tpu.memory_space<vmem>>, %arg4: memref<32x32xbf16, #tpu.memory_space<vmem>>, %arg5: memref<32x32xbf16, #tpu.memory_space<vmem>>, %arg6: memref<32x32xbf16, #tpu.memory_space<vmem>>, %arg7: memref<1x32xf32, #tpu.memory_space<vmem>>, %arg8: memref<1x32xf32, #tpu.memory_space<vmem>>, %arg9: memref<1x32xf32, #tpu.memory_space<vmem>>, %arg10: memref<16x32xf32, #tpu.memory_space<vmem>>) attributes {dimension_semantics = [#tpu.dimension_semantics<parallel>], iteration_bounds = array<i64: 1>, scalar_prefetch = 0 : i64, scratch_operands = 0 : i64, tpu.core_type = #tpu.core_type<tc>, window_params = [{transform_indices = @transform_0, window_bounds = array<i64: 16, 32>}, {transform_indices = @transform_1, window_bounds = array<i64: 16, 32>}, {transform_indices = @transform_2, window_bounds = array<i64: 16, 32>}, {pipeline_mode = #tpu.pipeline_mode<synchronous>, transform_indices = @transform_3, window_bounds = array<i64: 32, 32>}, {pipeline_mode = #tpu.pipeline_mode<synchronous>, transform_indices = @transform_4, window_bounds = array<i64: 32, 32>}, {pipeline_mode = #tpu.pipeline_mode<synchronous>, transform_indices = @transform_5, window_bounds = array<i64: 32, 32>}, {pipeline_mode = #tpu.pipeline_mode<synchronous>, transform_indices = @transform_6, window_bounds = array<i64: 1, 32>}, {pipeline_mode = #tpu.pipeline_mode<synchronous>, transform_indices = @transform_7, window_bounds = array<i64: 1, 32>}, {pipeline_mode = #tpu.pipeline_mode<synchronous>, transform_indices = @transform_8, window_bounds = array<i64: 1, 32>}, {transform_indices = @transform_9, window_bounds = array<i64: 16, 32>}]} {
    %c0 = arith.constant 0 : index
    %c0_0 = arith.constant 0 : index
    %0 = vector.load %arg1[%c0, %c0_0] : memref<16x32xbf16, #tpu.memory_space<vmem>>, vector<16x32xbf16>
    %c0_1 = arith.constant 0 : index
    %c0_2 = arith.constant 0 : index
    %1 = vector.load %arg4[%c0_1, %c0_2] : memref<32x32xbf16, #tpu.memory_space<vmem>>, vector<32x32xbf16>
    %cst = arith.constant dense<0.000000e+00> : vector<16x32xf32>
    %2 = tpu.matmul %0, %1, %cst {dimension_numbers = #tpu.dot_dimension_numbers<[1], [0], [0], [1], [0, 0, 1, 1], [], []>} : vector<16x32xbf16>, vector<32x32xbf16>, vector<16x32xf32> -> vector<16x32xf32>
    %c0_3 = arith.constant 0 : index
    %c0_4 = arith.constant 0 : index
    %3 = vector.load %arg7[%c0_3, %c0_4] : memref<1x32xf32, #tpu.memory_space<vmem>>, vector<1x32xf32>
    %4 = vector.broadcast %3 : vector<1x32xf32> to vector<16x32xf32>
    %5 = arith.addf %2, %4 : vector<16x32xf32>
    %c0_5 = arith.constant 0 : index
    %c0_6 = arith.constant 0 : index
    %6 = vector.load %arg2[%c0_5, %c0_6] : memref<16x32xbf16, #tpu.memory_space<vmem>>, vector<16x32xbf16>
    %c0_7 = arith.constant 0 : index
    %c0_8 = arith.constant 0 : index
    %7 = vector.load %arg5[%c0_7, %c0_8] : memref<32x32xbf16, #tpu.memory_space<vmem>>, vector<32x32xbf16>
    %cst_9 = arith.constant dense<0.000000e+00> : vector<16x32xf32>
    %8 = tpu.matmul %6, %7, %cst_9 {dimension_numbers = #tpu.dot_dimension_numbers<[1], [0], [0], [1], [0, 0, 1, 1], [], []>} : vector<16x32xbf16>, vector<32x32xbf16>, vector<16x32xf32> -> vector<16x32xf32>
    %c0_10 = arith.constant 0 : index
    %c0_11 = arith.constant 0 : index
    %9 = vector.load %arg8[%c0_10, %c0_11] : memref<1x32xf32, #tpu.memory_space<vmem>>, vector<1x32xf32>
    %10 = vector.broadcast %9 : vector<1x32xf32> to vector<16x32xf32>
    %11 = arith.addf %8, %10 : vector<16x32xf32>
    %c0_12 = arith.constant 0 : index
    %c0_13 = arith.constant 0 : index
    %12 = vector.load %arg3[%c0_12, %c0_13] : memref<16x32xbf16, #tpu.memory_space<vmem>>, vector<16x32xbf16>
    %c0_14 = arith.constant 0 : index
    %c0_15 = arith.constant 0 : index
    %13 = vector.load %arg6[%c0_14, %c0_15] : memref<32x32xbf16, #tpu.memory_space<vmem>>, vector<32x32xbf16>
    %cst_16 = arith.constant dense<0.000000e+00> : vector<16x32xf32>
    %14 = tpu.matmul %12, %13, %cst_16 {dimension_numbers = #tpu.dot_dimension_numbers<[1], [0], [0], [1], [0, 0, 1, 1], [], []>} : vector<16x32xbf16>, vector<32x32xbf16>, vector<16x32xf32> -> vector<16x32xf32>
    %c0_17 = arith.constant 0 : index
    %c0_18 = arith.constant 0 : index
    %15 = vector.load %arg9[%c0_17, %c0_18] : memref<1x32xf32, #tpu.memory_space<vmem>>, vector<1x32xf32>
    %16 = vector.broadcast %15 : vector<1x32xf32> to vector<16x32xf32>
    %17 = arith.addf %14, %16 : vector<16x32xf32>
    %18 = vector.extract_strided_slice %5 {offsets = [0, 0], sizes = [8, 8], strides = [1, 1]} : vector<16x32xf32> to vector<8x8xf32>
    %19 = arith.truncf %18 : vector<8x8xf32> to vector<8x8xbf16>
    %20 = vector.extract_strided_slice %11 {offsets = [0, 0], sizes = [8, 8], strides = [1, 1]} : vector<16x32xf32> to vector<8x8xf32>
    %21 = arith.truncf %20 : vector<8x8xf32> to vector<8x8xbf16>
    %22 = vector.extract_strided_slice %17 {offsets = [0, 0], sizes = [8, 8], strides = [1, 1]} : vector<16x32xf32> to vector<8x8xf32>
    %23 = arith.truncf %22 : vector<8x8xf32> to vector<8x8xbf16>
    %cst_19 = arith.constant dense<0.000000e+00> : vector<8x8xf32>
    %24 = tpu.matmul %19, %21, %cst_19 {dimension_numbers = #tpu.dot_dimension_numbers<[1], [1], [0], [0], [0, 0, 1, 0], [], []>} : vector<8x8xbf16>, vector<8x8xbf16>, vector<8x8xf32> -> vector<8x8xf32>
    %cst_20 = arith.constant 0.353553385 : f32
    %25 = vector.broadcast %cst_20 : f32 to vector<8x8xf32>
    %26 = arith.mulf %24, %25 : vector<8x8xf32>
    %cst_21 = arith.constant dense<0xFF800000> : vector<8xf32>
    %27 = vector.multi_reduction <maximumf>, %26, %cst_21 [1] : vector<8x8xf32> to vector<8xf32>
    %28 = vector.shape_cast %27 : vector<8xf32> to vector<8x1xf32>
    %29 = vector.broadcast %28 : vector<8x1xf32> to vector<8x8xf32>
    %30 = arith.subf %26, %29 : vector<8x8xf32>
    %31 = math.exp %30 : vector<8x8xf32>
    %cst_22 = arith.constant dense<0.000000e+00> : vector<8xf32>
    %32 = vector.multi_reduction <add>, %31, %cst_22 [1] : vector<8x8xf32> to vector<8xf32>
    %33 = vector.shape_cast %32 : vector<8xf32> to vector<8x1xf32>
    %34 = tpu.reciprocal %33 {approx = true} : vector<8x1xf32> -> vector<8x1xf32>
    %35 = vector.broadcast %34 : vector<8x1xf32> to vector<8x8xf32>
    %36 = arith.mulf %31, %35 : vector<8x8xf32>
    %37 = arith.truncf %36 : vector<8x8xf32> to vector<8x8xbf16>
    %cst_23 = arith.constant dense<0.000000e+00> : vector<8x8xf32>
    %38 = tpu.matmul %37, %23, %cst_23 {dimension_numbers = #tpu.dot_dimension_numbers<[1], [0], [0], [1], [0, 0, 1, 1], [], []>} : vector<8x8xbf16>, vector<8x8xbf16>, vector<8x8xf32> -> vector<8x8xf32>
    %c0_24 = arith.constant 0 : index
    %c0_25 = arith.constant 0 : index
    %39 = vector.load %arg10[%c0_24, %c0_25] : memref<16x32xf32, #tpu.memory_space<vmem>>, vector<8x8xf32>
    tpu.vector_store %arg10[%c0_24, %c0_25], %38 {strides = array<i32>} : memref<16x32xf32, #tpu.memory_space<vmem>>, vector<8x8xf32>,
    %40 = vector.extract_strided_slice %5 {offsets = [0, 8], sizes = [8, 8], strides = [1, 1]} : vector<16x32xf32> to vector<8x8xf32>
    %41 = arith.truncf %40 : vector<8x8xf32> to vector<8x8xbf16>
    %42 = vector.extract_strided_slice %11 {offsets = [0, 8], sizes = [8, 8], strides = [1, 1]} : vector<16x32xf32> to vector<8x8xf32>
    %43 = arith.truncf %42 : vector<8x8xf32> to vector<8x8xbf16>
    %44 = vector.extract_strided_slice %17 {offsets = [0, 8], sizes = [8, 8], strides = [1, 1]} : vector<16x32xf32> to vector<8x8xf32>
    %45 = arith.truncf %44 : vector<8x8xf32> to vector<8x8xbf16>
    %cst_26 = arith.constant dense<0.000000e+00> : vector<8x8xf32>
    %46 = tpu.matmul %41, %43, %cst_26 {dimension_numbers = #tpu.dot_dimension_numbers<[1], [1], [0], [0], [0, 0, 1, 0], [], []>} : vector<8x8xbf16>, vector<8x8xbf16>, vector<8x8xf32> -> vector<8x8xf32>
    %cst_27 = arith.constant 0.353553385 : f32
    %47 = vector.broadcast %cst_27 : f32 to vector<8x8xf32>
    %48 = arith.mulf %46, %47 : vector<8x8xf32>
    %cst_28 = arith.constant dense<0xFF800000> : vector<8xf32>
    %49 = vector.multi_reduction <maximumf>, %48, %cst_28 [1] : vector<8x8xf32> to vector<8xf32>
    %50 = vector.shape_cast %49 : vector<8xf32> to vector<8x1xf32>
    %51 = vector.broadcast %50 : vector<8x1xf32> to vector<8x8xf32>
    %52 = arith.subf %48, %51 : vector<8x8xf32>
    %53 = math.exp %52 : vector<8x8xf32>
    %cst_29 = arith.constant dense<0.000000e+00> : vector<8xf32>
    %54 = vector.multi_reduction <add>, %53, %cst_29 [1] : vector<8x8xf32> to vector<8xf32>
    %55 = vector.shape_cast %54 : vector<8xf32> to vector<8x1xf32>
    %56 = tpu.reciprocal %55 {approx = true} : vector<8x1xf32> -> vector<8x1xf32>
    %57 = vector.broadcast %56 : vector<8x1xf32> to vector<8x8xf32>
    %58 = arith.mulf %53, %57 : vector<8x8xf32>
    %59 = arith.truncf %58 : vector<8x8xf32> to vector<8x8xbf16>
    %cst_30 = arith.constant dense<0.000000e+00> : vector<8x8xf32>
    %60 = tpu.matmul %59, %45, %cst_30 {dimension_numbers = #tpu.dot_dimension_numbers<[1], [0], [0], [1], [0, 0, 1, 1], [], []>} : vector<8x8xbf16>, vector<8x8xbf16>, vector<8x8xf32> -> vector<8x8xf32>
    %c0_31 = arith.constant 0 : index
    %c8 = arith.constant 8 : index
    %61 = vector.load %arg10[%c0_31, %c8] : memref<16x32xf32, #tpu.memory_space<vmem>>, vector<8x8xf32>
    tpu.vector_store %arg10[%c0_31, %c8], %60 {strides = array<i32>} : memref<16x32xf32, #tpu.memory_space<vmem>>, vector<8x8xf32>,
    %62 = vector.extract_strided_slice %5 {offsets = [0, 16], sizes = [8, 8], strides = [1, 1]} : vector<16x32xf32> to vector<8x8xf32>
    %63 = arith.truncf %62 : vector<8x8xf32> to vector<8x8xbf16>
    %64 = vector.extract_strided_slice %11 {offsets = [0, 16], sizes = [8, 8], strides = [1, 1]} : vector<16x32xf32> to vector<8x8xf32>
    %65 = arith.truncf %64 : vector<8x8xf32> to vector<8x8xbf16>
    %66 = vector.extract_strided_slice %17 {offsets = [0, 16], sizes = [8, 8], strides = [1, 1]} : vector<16x32xf32> to vector<8x8xf32>
    %67 = arith.truncf %66 : vector<8x8xf32> to vector<8x8xbf16>
    %cst_32 = arith.constant dense<0.000000e+00> : vector<8x8xf32>
    %68 = tpu.matmul %63, %65, %cst_32 {dimension_numbers = #tpu.dot_dimension_numbers<[1], [1], [0], [0], [0, 0, 1, 0], [], []>} : vector<8x8xbf16>, vector<8x8xbf16>, vector<8x8xf32> -> vector<8x8xf32>
    %cst_33 = arith.constant 0.353553385 : f32
    %69 = vector.broadcast %cst_33 : f32 to vector<8x8xf32>
    %70 = arith.mulf %68, %69 : vector<8x8xf32>
    %cst_34 = arith.constant dense<0xFF800000> : vector<8xf32>
    %71 = vector.multi_reduction <maximumf>, %70, %cst_34 [1] : vector<8x8xf32> to vector<8xf32>
    %72 = vector.shape_cast %71 : vector<8xf32> to vector<8x1xf32>
    %73 = vector.broadcast %72 : vector<8x1xf32> to vector<8x8xf32>
    %74 = arith.subf %70, %73 : vector<8x8xf32>
    %75 = math.exp %74 : vector<8x8xf32>
    %cst_35 = arith.constant dense<0.000000e+00> : vector<8xf32>
    %76 = vector.multi_reduction <add>, %75, %cst_35 [1] : vector<8x8xf32> to vector<8xf32>
    %77 = vector.shape_cast %76 : vector<8xf32> to vector<8x1xf32>
    %78 = tpu.reciprocal %77 {approx = true} : vector<8x1xf32> -> vector<8x1xf32>
    %79 = vector.broadcast %78 : vector<8x1xf32> to vector<8x8xf32>
    %80 = arith.mulf %75, %79 : vector<8x8xf32>
    %81 = arith.truncf %80 : vector<8x8xf32> to vector<8x8xbf16>
    %cst_36 = arith.constant dense<0.000000e+00> : vector<8x8xf32>
    %82 = tpu.matmul %81, %67, %cst_36 {dimension_numbers = #tpu.dot_dimension_numbers<[1], [0], [0], [1], [0, 0, 1, 1], [], []>} : vector<8x8xbf16>, vector<8x8xbf16>, vector<8x8xf32> -> vector<8x8xf32>
    %c0_37 = arith.constant 0 : index
    %c16 = arith.constant 16 : index
    %83 = vector.load %arg10[%c0_37, %c16] : memref<16x32xf32, #tpu.memory_space<vmem>>, vector<8x8xf32>
    tpu.vector_store %arg10[%c0_37, %c16], %82 {strides = array<i32>} : memref<16x32xf32, #tpu.memory_space<vmem>>, vector<8x8xf32>,
    %84 = vector.extract_strided_slice %5 {offsets = [0, 24], sizes = [8, 8], strides = [1, 1]} : vector<16x32xf32> to vector<8x8xf32>
    %85 = arith.truncf %84 : vector<8x8xf32> to vector<8x8xbf16>
    %86 = vector.extract_strided_slice %11 {offsets = [0, 24], sizes = [8, 8], strides = [1, 1]} : vector<16x32xf32> to vector<8x8xf32>
    %87 = arith.truncf %86 : vector<8x8xf32> to vector<8x8xbf16>
    %88 = vector.extract_strided_slice %17 {offsets = [0, 24], sizes = [8, 8], strides = [1, 1]} : vector<16x32xf32> to vector<8x8xf32>
    %89 = arith.truncf %88 : vector<8x8xf32> to vector<8x8xbf16>
    %cst_38 = arith.constant dense<0.000000e+00> : vector<8x8xf32>
    %90 = tpu.matmul %85, %87, %cst_38 {dimension_numbers = #tpu.dot_dimension_numbers<[1], [1], [0], [0], [0, 0, 1, 0], [], []>} : vector<8x8xbf16>, vector<8x8xbf16>, vector<8x8xf32> -> vector<8x8xf32>
    %cst_39 = arith.constant 0.353553385 : f32
    %91 = vector.broadcast %cst_39 : f32 to vector<8x8xf32>
    %92 = arith.mulf %90, %91 : vector<8x8xf32>
    %cst_40 = arith.constant dense<0xFF800000> : vector<8xf32>
    %93 = vector.multi_reduction <maximumf>, %92, %cst_40 [1] : vector<8x8xf32> to vector<8xf32>
    %94 = vector.shape_cast %93 : vector<8xf32> to vector<8x1xf32>
    %95 = vector.broadcast %94 : vector<8x1xf32> to vector<8x8xf32>
    %96 = arith.subf %92, %95 : vector<8x8xf32>
    %97 = math.exp %96 : vector<8x8xf32>
    %cst_41 = arith.constant dense<0.000000e+00> : vector<8xf32>
    %98 = vector.multi_reduction <add>, %97, %cst_41 [1] : vector<8x8xf32> to vector<8xf32>
    %99 = vector.shape_cast %98 : vector<8xf32> to vector<8x1xf32>
    %100 = tpu.reciprocal %99 {approx = true} : vector<8x1xf32> -> vector<8x1xf32>
    %101 = vector.broadcast %100 : vector<8x1xf32> to vector<8x8xf32>
    %102 = arith.mulf %97, %101 : vector<8x8xf32>
    %103 = arith.truncf %102 : vector<8x8xf32> to vector<8x8xbf16>
    %cst_42 = arith.constant dense<0.000000e+00> : vector<8x8xf32>
    %104 = tpu.matmul %103, %89, %cst_42 {dimension_numbers = #tpu.dot_dimension_numbers<[1], [0], [0], [1], [0, 0, 1, 1], [], []>} : vector<8x8xbf16>, vector<8x8xbf16>, vector<8x8xf32> -> vector<8x8xf32>
    %c0_43 = arith.constant 0 : index
    %c24 = arith.constant 24 : index
    %105 = vector.load %arg10[%c0_43, %c24] : memref<16x32xf32, #tpu.memory_space<vmem>>, vector<8x8xf32>
    tpu.vector_store %arg10[%c0_43, %c24], %104 {strides = array<i32>} : memref<16x32xf32, #tpu.memory_space<vmem>>, vector<8x8xf32>,
    %106 = vector.extract_strided_slice %5 {offsets = [8, 0], sizes = [8, 8], strides = [1, 1]} : vector<16x32xf32> to vector<8x8xf32>
    %107 = arith.truncf %106 : vector<8x8xf32> to vector<8x8xbf16>
    %108 = vector.extract_strided_slice %11 {offsets = [8, 0], sizes = [8, 8], strides = [1, 1]} : vector<16x32xf32> to vector<8x8xf32>
    %109 = arith.truncf %108 : vector<8x8xf32> to vector<8x8xbf16>
    %110 = vector.extract_strided_slice %17 {offsets = [8, 0], sizes = [8, 8], strides = [1, 1]} : vector<16x32xf32> to vector<8x8xf32>
    %111 = arith.truncf %110 : vector<8x8xf32> to vector<8x8xbf16>
    %cst_44 = arith.constant dense<0.000000e+00> : vector<8x8xf32>
    %112 = tpu.matmul %107, %109, %cst_44 {dimension_numbers = #tpu.dot_dimension_numbers<[1], [1], [0], [0], [0, 0, 1, 0], [], []>} : vector<8x8xbf16>, vector<8x8xbf16>, vector<8x8xf32> -> vector<8x8xf32>
    %cst_45 = arith.constant 0.353553385 : f32
    %113 = vector.broadcast %cst_45 : f32 to vector<8x8xf32>
    %114 = arith.mulf %112, %113 : vector<8x8xf32>
    %cst_46 = arith.constant dense<0xFF800000> : vector<8xf32>
    %115 = vector.multi_reduction <maximumf>, %114, %cst_46 [1] : vector<8x8xf32> to vector<8xf32>
    %116 = vector.shape_cast %115 : vector<8xf32> to vector<8x1xf32>
    %117 = vector.broadcast %116 : vector<8x1xf32> to vector<8x8xf32>
    %118 = arith.subf %114, %117 : vector<8x8xf32>
    %119 = math.exp %118 : vector<8x8xf32>
    %cst_47 = arith.constant dense<0.000000e+00> : vector<8xf32>
    %120 = vector.multi_reduction <add>, %119, %cst_47 [1] : vector<8x8xf32> to vector<8xf32>
    %121 = vector.shape_cast %120 : vector<8xf32> to vector<8x1xf32>
    %122 = tpu.reciprocal %121 {approx = true} : vector<8x1xf32> -> vector<8x1xf32>
    %123 = vector.broadcast %122 : vector<8x1xf32> to vector<8x8xf32>
    %124 = arith.mulf %119, %123 : vector<8x8xf32>
    %125 = arith.truncf %124 : vector<8x8xf32> to vector<8x8xbf16>
    %cst_48 = arith.constant dense<0.000000e+00> : vector<8x8xf32>
    %126 = tpu.matmul %125, %111, %cst_48 {dimension_numbers = #tpu.dot_dimension_numbers<[1], [0], [0], [1], [0, 0, 1, 1], [], []>} : vector<8x8xbf16>, vector<8x8xbf16>, vector<8x8xf32> -> vector<8x8xf32>
    %c8_49 = arith.constant 8 : index
    %c0_50 = arith.constant 0 : index
    %127 = vector.load %arg10[%c8_49, %c0_50] : memref<16x32xf32, #tpu.memory_space<vmem>>, vector<8x8xf32>
    tpu.vector_store %arg10[%c8_49, %c0_50], %126 {strides = array<i32>} : memref<16x32xf32, #tpu.memory_space<vmem>>, vector<8x8xf32>,
    %128 = vector.extract_strided_slice %5 {offsets = [8, 8], sizes = [8, 8], strides = [1, 1]} : vector<16x32xf32> to vector<8x8xf32>
    %129 = arith.truncf %128 : vector<8x8xf32> to vector<8x8xbf16>
    %130 = vector.extract_strided_slice %11 {offsets = [8, 8], sizes = [8, 8], strides = [1, 1]} : vector<16x32xf32> to vector<8x8xf32>
    %131 = arith.truncf %130 : vector<8x8xf32> to vector<8x8xbf16>
    %132 = vector.extract_strided_slice %17 {offsets = [8, 8], sizes = [8, 8], strides = [1, 1]} : vector<16x32xf32> to vector<8x8xf32>
    %133 = arith.truncf %132 : vector<8x8xf32> to vector<8x8xbf16>
    %cst_51 = arith.constant dense<0.000000e+00> : vector<8x8xf32>
    %134 = tpu.matmul %129, %131, %cst_51 {dimension_numbers = #tpu.dot_dimension_numbers<[1], [1], [0], [0], [0, 0, 1, 0], [], []>} : vector<8x8xbf16>, vector<8x8xbf16>, vector<8x8xf32> -> vector<8x8xf32>
    %cst_52 = arith.constant 0.353553385 : f32
    %135 = vector.broadcast %cst_52 : f32 to vector<8x8xf32>
    %136 = arith.mulf %134, %135 : vector<8x8xf32>
    %cst_53 = arith.constant dense<0xFF800000> : vector<8xf32>
    %137 = vector.multi_reduction <maximumf>, %136, %cst_53 [1] : vector<8x8xf32> to vector<8xf32>
    %138 = vector.shape_cast %137 : vector<8xf32> to vector<8x1xf32>
    %139 = vector.broadcast %138 : vector<8x1xf32> to vector<8x8xf32>
    %140 = arith.subf %136, %139 : vector<8x8xf32>
    %141 = math.exp %140 : vector<8x8xf32>
    %cst_54 = arith.constant dense<0.000000e+00> : vector<8xf32>
    %142 = vector.multi_reduction <add>, %141, %cst_54 [1] : vector<8x8xf32> to vector<8xf32>
    %143 = vector.shape_cast %142 : vector<8xf32> to vector<8x1xf32>
    %144 = tpu.reciprocal %143 {approx = true} : vector<8x1xf32> -> vector<8x1xf32>
    %145 = vector.broadcast %144 : vector<8x1xf32> to vector<8x8xf32>
    %146 = arith.mulf %141, %145 : vector<8x8xf32>
    %147 = arith.truncf %146 : vector<8x8xf32> to vector<8x8xbf16>
    %cst_55 = arith.constant dense<0.000000e+00> : vector<8x8xf32>
    %148 = tpu.matmul %147, %133, %cst_55 {dimension_numbers = #tpu.dot_dimension_numbers<[1], [0], [0], [1], [0, 0, 1, 1], [], []>} : vector<8x8xbf16>, vector<8x8xbf16>, vector<8x8xf32> -> vector<8x8xf32>
    %c8_56 = arith.constant 8 : index
    %c8_57 = arith.constant 8 : index
    %149 = vector.load %arg10[%c8_56, %c8_57] : memref<16x32xf32, #tpu.memory_space<vmem>>, vector<8x8xf32>
    tpu.vector_store %arg10[%c8_56, %c8_57], %148 {strides = array<i32>} : memref<16x32xf32, #tpu.memory_space<vmem>>, vector<8x8xf32>,
    %150 = vector.extract_strided_slice %5 {offsets = [8, 16], sizes = [8, 8], strides = [1, 1]} : vector<16x32xf32> to vector<8x8xf32>
    %151 = arith.truncf %150 : vector<8x8xf32> to vector<8x8xbf16>
    %152 = vector.extract_strided_slice %11 {offsets = [8, 16], sizes = [8, 8], strides = [1, 1]} : vector<16x32xf32> to vector<8x8xf32>
    %153 = arith.truncf %152 : vector<8x8xf32> to vector<8x8xbf16>
    %154 = vector.extract_strided_slice %17 {offsets = [8, 16], sizes = [8, 8], strides = [1, 1]} : vector<16x32xf32> to vector<8x8xf32>
    %155 = arith.truncf %154 : vector<8x8xf32> to vector<8x8xbf16>
    %cst_58 = arith.constant dense<0.000000e+00> : vector<8x8xf32>
    %156 = tpu.matmul %151, %153, %cst_58 {dimension_numbers = #tpu.dot_dimension_numbers<[1], [1], [0], [0], [0, 0, 1, 0], [], []>} : vector<8x8xbf16>, vector<8x8xbf16>, vector<8x8xf32> -> vector<8x8xf32>
    %cst_59 = arith.constant 0.353553385 : f32
    %157 = vector.broadcast %cst_59 : f32 to vector<8x8xf32>
    %158 = arith.mulf %156, %157 : vector<8x8xf32>
    %cst_60 = arith.constant dense<0xFF800000> : vector<8xf32>
    %159 = vector.multi_reduction <maximumf>, %158, %cst_60 [1] : vector<8x8xf32> to vector<8xf32>
    %160 = vector.shape_cast %159 : vector<8xf32> to vector<8x1xf32>
    %161 = vector.broadcast %160 : vector<8x1xf32> to vector<8x8xf32>
    %162 = arith.subf %158, %161 : vector<8x8xf32>
    %163 = math.exp %162 : vector<8x8xf32>
    %cst_61 = arith.constant dense<0.000000e+00> : vector<8xf32>
    %164 = vector.multi_reduction <add>, %163, %cst_61 [1] : vector<8x8xf32> to vector<8xf32>
    %165 = vector.shape_cast %164 : vector<8xf32> to vector<8x1xf32>
    %166 = tpu.reciprocal %165 {approx = true} : vector<8x1xf32> -> vector<8x1xf32>
    %167 = vector.broadcast %166 : vector<8x1xf32> to vector<8x8xf32>
    %168 = arith.mulf %163, %167 : vector<8x8xf32>
    %169 = arith.truncf %168 : vector<8x8xf32> to vector<8x8xbf16>
    %cst_62 = arith.constant dense<0.000000e+00> : vector<8x8xf32>
    %170 = tpu.matmul %169, %155, %cst_62 {dimension_numbers = #tpu.dot_dimension_numbers<[1], [0], [0], [1], [0, 0, 1, 1], [], []>} : vector<8x8xbf16>, vector<8x8xbf16>, vector<8x8xf32> -> vector<8x8xf32>
    %c8_63 = arith.constant 8 : index
    %c16_64 = arith.constant 16 : index
    %171 = vector.load %arg10[%c8_63, %c16_64] : memref<16x32xf32, #tpu.memory_space<vmem>>, vector<8x8xf32>
    tpu.vector_store %arg10[%c8_63, %c16_64], %170 {strides = array<i32>} : memref<16x32xf32, #tpu.memory_space<vmem>>, vector<8x8xf32>,
    %172 = vector.extract_strided_slice %5 {offsets = [8, 24], sizes = [8, 8], strides = [1, 1]} : vector<16x32xf32> to vector<8x8xf32>
    %173 = arith.truncf %172 : vector<8x8xf32> to vector<8x8xbf16>
    %174 = vector.extract_strided_slice %11 {offsets = [8, 24], sizes = [8, 8], strides = [1, 1]} : vector<16x32xf32> to vector<8x8xf32>
    %175 = arith.truncf %174 : vector<8x8xf32> to vector<8x8xbf16>
    %176 = vector.extract_strided_slice %17 {offsets = [8, 24], sizes = [8, 8], strides = [1, 1]} : vector<16x32xf32> to vector<8x8xf32>
    %177 = arith.truncf %176 : vector<8x8xf32> to vector<8x8xbf16>
    %cst_65 = arith.constant dense<0.000000e+00> : vector<8x8xf32>
    %178 = tpu.matmul %173, %175, %cst_65 {dimension_numbers = #tpu.dot_dimension_numbers<[1], [1], [0], [0], [0, 0, 1, 0], [], []>} : vector<8x8xbf16>, vector<8x8xbf16>, vector<8x8xf32> -> vector<8x8xf32>
    %cst_66 = arith.constant 0.353553385 : f32
    %179 = vector.broadcast %cst_66 : f32 to vector<8x8xf32>
    %180 = arith.mulf %178, %179 : vector<8x8xf32>
    %cst_67 = arith.constant dense<0xFF800000> : vector<8xf32>
    %181 = vector.multi_reduction <maximumf>, %180, %cst_67 [1] : vector<8x8xf32> to vector<8xf32>
    %182 = vector.shape_cast %181 : vector<8xf32> to vector<8x1xf32>
    %183 = vector.broadcast %182 : vector<8x1xf32> to vector<8x8xf32>
    %184 = arith.subf %180, %183 : vector<8x8xf32>
    %185 = math.exp %184 : vector<8x8xf32>
    %cst_68 = arith.constant dense<0.000000e+00> : vector<8xf32>
    %186 = vector.multi_reduction <add>, %185, %cst_68 [1] : vector<8x8xf32> to vector<8xf32>
    %187 = vector.shape_cast %186 : vector<8xf32> to vector<8x1xf32>
    %188 = tpu.reciprocal %187 {approx = true} : vector<8x1xf32> -> vector<8x1xf32>
    %189 = vector.broadcast %188 : vector<8x1xf32> to vector<8x8xf32>
    %190 = arith.mulf %185, %189 : vector<8x8xf32>
    %191 = arith.truncf %190 : vector<8x8xf32> to vector<8x8xbf16>
    %cst_69 = arith.constant dense<0.000000e+00> : vector<8x8xf32>
    %192 = tpu.matmul %191, %177, %cst_69 {dimension_numbers = #tpu.dot_dimension_numbers<[1], [0], [0], [1], [0, 0, 1, 1], [], []>} : vector<8x8xbf16>, vector<8x8xbf16>, vector<8x8xf32> -> vector<8x8xf32>
    %c8_70 = arith.constant 8 : index
    %c24_71 = arith.constant 24 : index
    %193 = vector.load %arg10[%c8_70, %c24_71] : memref<16x32xf32, #tpu.memory_space<vmem>>, vector<8x8xf32>
    tpu.vector_store %arg10[%c8_70, %c24_71], %192 {strides = array<i32>} : memref<16x32xf32, #tpu.memory_space<vmem>>, vector<8x8xf32>,
    return
  }
  func.func @transform_0(%arg0: i32) -> (i32, i32) {
    %c0_i32 = arith.constant 0 : i32
    %c0_i32_0 = arith.constant 0 : i32
    return %arg0, %c0_i32 : i32, i32
  }
  func.func @transform_1(%arg0: i32) -> (i32, i32) {
    %c0_i32 = arith.constant 0 : i32
    %c0_i32_0 = arith.constant 0 : i32
    return %arg0, %c0_i32 : i32, i32
  }
  func.func @transform_2(%arg0: i32) -> (i32, i32) {
    %c0_i32 = arith.constant 0 : i32
    %c0_i32_0 = arith.constant 0 : i32
    return %arg0, %c0_i32 : i32, i32
  }
  func.func @transform_3(%arg0: i32) -> (i32, i32) {
    %c0_i32 = arith.constant 0 : i32
    %c0_i32_0 = arith.constant 0 : i32
    %c0_i32_1 = arith.constant 0 : i32
    return %c0_i32, %c0_i32_0 : i32, i32
  }
  func.func @transform_4(%arg0: i32) -> (i32, i32) {
    %c0_i32 = arith.constant 0 : i32
    %c0_i32_0 = arith.constant 0 : i32
    %c0_i32_1 = arith.constant 0 : i32
    return %c0_i32, %c0_i32_0 : i32, i32
  }
  func.func @transform_5(%arg0: i32) -> (i32, i32) {
    %c0_i32 = arith.constant 0 : i32
    %c0_i32_0 = arith.constant 0 : i32
    %c0_i32_1 = arith.constant 0 : i32
    return %c0_i32, %c0_i32_0 : i32, i32
  }
  func.func @transform_6(%arg0: i32) -> (i32, i32) {
    %c0_i32 = arith.constant 0 : i32
    %c0_i32_0 = arith.constant 0 : i32
    %c0_i32_1 = arith.constant 0 : i32
    return %c0_i32, %c0_i32_0 : i32, i32
  }
  func.func @transform_7(%arg0: i32) -> (i32, i32) {
    %c0_i32 = arith.constant 0 : i32
    %c0_i32_0 = arith.constant 0 : i32
    %c0_i32_1 = arith.constant 0 : i32
    return %c0_i32, %c0_i32_0 : i32, i32
  }
  func.func @transform_8(%arg0: i32) -> (i32, i32) {
    %c0_i32 = arith.constant 0 : i32
    %c0_i32_0 = arith.constant 0 : i32
    %c0_i32_1 = arith.constant 0 : i32
    return %c0_i32, %c0_i32_0 : i32, i32
  }
  func.func @transform_9(%arg0: i32) -> (i32, i32) {
    %c0_i32 = arith.constant 0 : i32
    %c0_i32_0 = arith.constant 0 : i32
    return %arg0, %c0_i32 : i32, i32
  }
}

</mosaic_0001>

<llo_original>
// kernel: tpu_custom_call.1
$region0: #{tpu_custom_call.1}
  #allocation0 [shape = 'u32[]', space=smem, size = 0x4, offset = 0x4, fixed_abs, tag = 'smem constant byte address 0x4 - core index']
  #allocation1 [shape = 'u32[144,128]{1,0:T(1,128)}', space=vmem, size = 0x12000, scoped, tag = 'internal scratch']
  %s0 = inlined_call_operand.hbm [shape: bf16[16,32], index: 0, kind: input, shape index: {}]
  %s1 = inlined_call_operand.hbm [shape: bf16[16,32], index: 1, kind: input, shape index: {}]
  %s2 = inlined_call_operand.hbm [shape: bf16[16,32], index: 2, kind: input, shape index: {}]
  %s3 = inlined_call_operand.hbm [shape: bf16[32,32], index: 3, kind: input, shape index: {}]
  %s4 = inlined_call_operand.hbm [shape: bf16[32,32], index: 4, kind: input, shape index: {}]
  %s5 = inlined_call_operand.vmem [shape: bf16[32,32], index: 5, kind: input, shape index: {}]
  %s6 = inlined_call_operand.vmem [shape: f32[1,32], index: 6, kind: input, shape index: {}]
  %s7 = inlined_call_operand.vmem [shape: f32[1,32], index: 7, kind: input, shape index: {}]
  %s8 = inlined_call_operand.vmem [shape: f32[1,32], index: 8, kind: input, shape index: {}]
  %s9 = inlined_call_operand.hbm [shape: f32[16,32], index: 9, kind: output, shape index: {}]
  %s10 = sld [smem:[#allocation0]]
  $region66: #{tpu_custom_call.1} parent=0
    _
  %s12 = ssub.s32 1, %s10
  %s13 = scalar_select 0, %s12, %s10
  $region1: #{tpu_custom_call.1} parent=0
    #allocation2 [shape = 'u8[4096]{0}', space=vmem, size = 0x1000, scoped, tag = 'input window, operand 0, single buffered']
    #allocation3 [shape = 's32[1]{0}', space=sflag, size = 0x4, scoped, tag = 'scoped memory for tpu_custom_call.1']
    #allocation4 [shape = 's32[1]{0}', space=sflag, size = 0x4, scoped, tag = 'scoped memory for tpu_custom_call.1']
    #allocation5 [shape = 'u8[4096]{0}', space=vmem, size = 0x1000, scoped, tag = 'input window, operand 1, single buffered']
    #allocation6 [shape = 's32[1]{0}', space=sflag, size = 0x4, scoped, tag = 'scoped memory for tpu_custom_call.1']
    #allocation7 [shape = 'u8[4096]{0}', space=vmem, size = 0x1000, scoped, tag = 'input window, operand 2, single buffered']
    #allocation8 [shape = 'u8[8192]{0}', space=vmem, size = 0x2000, scoped, tag = 'input window, operand 3, single buffered']
    #allocation9 [shape = 's32[1]{0}', space=sflag, size = 0x4, scoped, tag = 'scoped memory for tpu_custom_call.1']
    #allocation10 [shape = 'u8[8192]{0}', space=vmem, size = 0x2000, scoped, tag = 'input window, operand 4, single buffered']
    #allocation11 [shape = 'u8[8192]{0}', space=vmem, size = 0x2000, scoped, tag = 'output window, operand 0, single buffered']
    %14 = vsyncpa [#allocation3], 0
    %15 = vsyncpa [#allocation6], 0
    %16 = vsyncpa [#allocation9], 0
    %17 = vsyncpa [#allocation4], 0
    // Predicated region
    $region2: #{tpu_custom_call.1} parent=1 // pred_check
      _
    $region3: #{tpu_custom_call.1} parent=1 // pred_check_branch
      %19 = sbr.rel (0) target = $region5
    $region4: #{tpu_custom_call.1} parent=1 // pred_region
      %s21 = ssub.s32 128, 128
      %22 = vsyncadd [#allocation3], %s21
      %s23 = sshll.u32 [#allocation2], 4
      %s24 = int_to_ptr.vmem [resolvable:$true] %s23
      %29 = dma.hbm_to_vmem [thread:$0]  %s0, 128, %s24, [#allocation3], 64, 64, 4
    $region5: #{tpu_custom_call.1} parent=1 // pred_fallthru
      _
    // Predicated region
    $region6: #{tpu_custom_call.1} parent=1 // pred_check
      _
    $region7: #{tpu_custom_call.1} parent=1 // pred_check_branch
      %31 = sbr.rel (0) target = $region9
    $region8: #{tpu_custom_call.1} parent=1 // pred_region
      %s33 = ssub.s32 128, 128
      %34 = vsyncadd [#allocation6], %s33
      %s35 = sshll.u32 [#allocation5], 4
      %s36 = int_to_ptr.vmem [resolvable:$true] %s35
      %41 = dma.hbm_to_vmem [thread:$0]  %s1, 128, %s36, [#allocation6], 64, 64, 4
    $region9: #{tpu_custom_call.1} parent=1 // pred_fallthru
      _
    // Predicated region
    $region10: #{tpu_custom_call.1} parent=1 // pred_check
      _
    $region11: #{tpu_custom_call.1} parent=1 // pred_check_branch
      %43 = sbr.rel (0) target = $region13
    $region12: #{tpu_custom_call.1} parent=1 // pred_region
      %s45 = ssub.s32 128, 128
      %46 = vsyncadd [#allocation6], %s45
      %s47 = sshll.u32 [#allocation7], 4
      %s48 = int_to_ptr.vmem [resolvable:$true] %s47
      %53 = dma.hbm_to_vmem [thread:$0]  %s2, 128, %s48, [#allocation6], 64, 64, 4
    $region13: #{tpu_custom_call.1} parent=1 // pred_fallthru
      _
    // Predicated region
    $region14: #{tpu_custom_call.1} parent=1 // pred_check
      _
    $region15: #{tpu_custom_call.1} parent=1 // pred_check_branch
      %55 = sbr.rel (0) target = $region17
    $region16: #{tpu_custom_call.1} parent=1 // pred_region
      %s57 = ssub.s32 256, 256
      %58 = vsyncadd [#allocation9], %s57
      %s59 = sshll.u32 [#allocation8], 4
      %s60 = int_to_ptr.vmem [resolvable:$true] %s59
      %65 = dma.hbm_to_vmem [thread:$0]  %s3, 256, %s60, [#allocation9], 64, 64, 4
    $region17: #{tpu_custom_call.1} parent=1 // pred_fallthru
      _
    // Predicated region
    $region18: #{tpu_custom_call.1} parent=1 // pred_check
      _
    $region19: #{tpu_custom_call.1} parent=1 // pred_check_branch
      %67 = sbr.rel (0) target = $region21
    $region20: #{tpu_custom_call.1} parent=1 // pred_region
      %s69 = ssub.s32 256, 256
      %70 = vsyncadd [#allocation9], %s69
      %s71 = sshll.u32 [#allocation10], 4
      %s72 = int_to_ptr.vmem [resolvable:$true] %s71
      %77 = dma.hbm_to_vmem [thread:$0]  %s4, 256, %s72, [#allocation9], 64, 64, 4
    $region21: #{tpu_custom_call.1} parent=1 // pred_fallthru
      _
    // Predicated region
    $region22: #{tpu_custom_call.1} parent=1 // pred_check
      _
    $region23: #{tpu_custom_call.1} parent=1 // pred_check_branch
      %79 = sbr.rel (0) target = $region25
    $region24: #{tpu_custom_call.1} parent=1 // pred_region
      _
    $region25: #{tpu_custom_call.1} parent=1 // pred_fallthru
      _
    // Predicated region
    $region26: #{tpu_custom_call.1} parent=1 // pred_check
      _
    $region27: #{tpu_custom_call.1} parent=1 // pred_check_branch
      %81 = sbr.rel (0) target = $region29
    $region28: #{tpu_custom_call.1} parent=1 // pred_region
      _
    $region29: #{tpu_custom_call.1} parent=1 // pred_fallthru
      _
    // Predicated region
    $region30: #{tpu_custom_call.1} parent=1 // pred_check
      _
    $region31: #{tpu_custom_call.1} parent=1 // pred_check_branch
      %83 = sbr.rel (0) target = $region33
    $region32: #{tpu_custom_call.1} parent=1 // pred_region
      _
    $region33: #{tpu_custom_call.1} parent=1 // pred_fallthru
      _
    // Predicated region
    $region34: #{tpu_custom_call.1} parent=1 // pred_check
      _
    $region35: #{tpu_custom_call.1} parent=1 // pred_check_branch
      %85 = sbr.rel (0) target = $region37
    $region36: #{tpu_custom_call.1} parent=1 // pred_region
      _
    $region37: #{tpu_custom_call.1} parent=1 // pred_fallthru
      _
    // Predicated region
    $region38: #{tpu_custom_call.1} parent=1 // pred_check
      _
    $region39: #{tpu_custom_call.1} parent=1 // pred_check_branch
      %87 = sbr.rel (0) target = $region41
    $region40: #{tpu_custom_call.1} parent=1 // pred_region
      %88 = dma.done [#allocation3], 128
    $region41: #{tpu_custom_call.1} parent=1 // pred_fallthru
      _
    // Predicated region
    $region42: #{tpu_custom_call.1} parent=1 // pred_check
      _
    $region43: #{tpu_custom_call.1} parent=1 // pred_check_branch
      %90 = sbr.rel (0) target = $region45
    $region44: #{tpu_custom_call.1} parent=1 // pred_region
      %91 = dma.done [#allocation6], 128
    $region45: #{tpu_custom_call.1} parent=1 // pred_fallthru
      _
    // Predicated region
    $region46: #{tpu_custom_call.1} parent=1 // pred_check
      _
    $region47: #{tpu_custom_call.1} parent=1 // pred_check_branch
      %93 = sbr.rel (0) target = $region49
    $region48: #{tpu_custom_call.1} parent=1 // pred_region
      %94 = dma.done [#allocation6], 128
    $region49: #{tpu_custom_call.1} parent=1 // pred_fallthru
      _
    // Predicated region
    $region50: #{tpu_custom_call.1} parent=1 // pred_check
      _
    $region51: #{tpu_custom_call.1} parent=1 // pred_check_branch
      %96 = sbr.rel (0) target = $region53
    $region52: #{tpu_custom_call.1} parent=1 // pred_region
      %97 = dma.done [#allocation9], 256
    $region53: #{tpu_custom_call.1} parent=1 // pred_fallthru
      _
    // Predicated region
    $region54: #{tpu_custom_call.1} parent=1 // pred_check
      _
    $region55: #{tpu_custom_call.1} parent=1 // pred_check_branch
      %99 = sbr.rel (0) target = $region57
    $region56: #{tpu_custom_call.1} parent=1 // pred_region
      %100 = dma.done [#allocation9], 256
    $region57: #{tpu_custom_call.1} parent=1 // pred_fallthru
      _
    %v102 = vld [vmem:[#allocation2] sm:$0xf]
    %v103 = vld [vmem:[#allocation2 + $0x4] sm:$0xf]
    %v104 = vld [vmem:[#allocation8] sm:$0xf]
    %v105 = vld [vmem:[#allocation8 + $0x4] sm:$0xf]
    %v106 = vld [vmem:[#allocation8 + $0x8] sm:$0xf]
    %v107 = vld [vmem:[#allocation8 + $0xc] sm:$0xf]
    %v108 = vld [vmem:[%s6] sm:$0x1]
    %v110 = vlaneseq
    %v111 = vshrl.u32 %v110, 7
    %v112 = vsub.s32 0, %v111
    %v113 = vrot.slane %v108, %v112
    %v117 = vunpack.c.l.b16 %v102
    %v118 = vunpack.c.l.b16 %v103
    %v119 = vpack.c.b16 %v118, %v117
    %v124 = vunpack.c.l.b16 %v104
    %v125 = vunpack.c.l.b16 %v105
    %v126 = vunpack.c.l.b16 %v106
    %v127 = vunpack.c.l.b16 %v107
    %v128 = vpack.c.b16 %v125, %v124
    %v129 = vpack.c.b16 %v127, %v126
    %vm132 = vcmask 261120
    %v134 = vsel %vm132, %v119, 0
    %136 = vmatprep.subr.bf16.mxu0 0
    %137 = vmatpush1.bf16.msra.mxu0 %v128
    %138 = vmatprep.subr.bf16.mxu0 0
    %139 = vmatpush1.bf16.msra.mxu0 %v129
    %140 = vmatprep.subr.bf16.mxu0 0
    %141 = vmatpush1.bf16.msra.mxu0 0
    %142 = vmatprep.subr.bf16.mxu0 0
    %143 = vmatpush1.bf16.msra.mxu0 0
    %144 = vmatprep.subr.bf16.mxu0 0
    %145 = vmatpush1.bf16.msra.mxu0 0
    %146 = vmatprep.subr.bf16.mxu0 0
    %147 = vmatpush1.bf16.msra.mxu0 0
    %148 = vmatprep.subr.bf16.mxu0 0
    %149 = vmatpush1.bf16.msra.mxu0 0
    %150 = vmatprep.subr.bf16.mxu0 0
    %151 = vmatpush1.bf16.msra.mxu0 0
    %152 = vmatprep.subr.bf16.mxu0 0
    %153 = vmatpush1.bf16.msra.mxu0 0
    %154 = vmatprep.subr.bf16.mxu0 0
    %155 = vmatpush1.bf16.msra.mxu0 0
    %156 = vmatprep.subr.bf16.mxu0 0
    %157 = vmatpush1.bf16.msra.mxu0 0
    %158 = vmatprep.subr.bf16.mxu0 0
    %159 = vmatpush1.bf16.msra.mxu0 0
    %160 = vmatprep.subr.bf16.mxu0 0
    %161 = vmatpush1.bf16.msra.mxu0 0
    %162 = vmatprep.subr.bf16.mxu0 0
    %163 = vmatpush1.bf16.msra.mxu0 0
    %164 = vmatprep.subr.bf16.mxu0 0
    %165 = vmatpush1.bf16.msra.mxu0 0
    %166 = vmatprep.subr.bf16.mxu0 0
    %167 = vmatpush1.bf16.msra.mxu0 0
    %168 = vmatprep.mubr.bf16.mxu0 0
    %169 = vmatmul.mubr.bf16.gmra.mrb[0].mxu0 %v134
    %v170 = vpop.f32.mrb[0].mxu0
    %v171 = vadd.f32 %v113, %v170
    %v172 = vpop.f32.mrb[0].mxu0
    %v173 = vpop.f32.mrb[0].mxu0
    %v174 = vadd.f32 %v113, %v173
    %v175 = vpop.f32.mrb[0].mxu0
    %176 = vdwg.mxu0
    %v177 = vld [vmem:[#allocation5] sm:$0xf]
    %v178 = vld [vmem:[#allocation5 + $0x4] sm:$0xf]
    %v179 = vld [vmem:[#allocation10] sm:$0xf]
    %v180 = vld [vmem:[#allocation10 + $0x4] sm:$0xf]
    %v181 = vld [vmem:[#allocation10 + $0x8] sm:$0xf]
    %v182 = vld [vmem:[#allocation10 + $0xc] sm:$0xf]
    %v183 = vld [vmem:[%s7] sm:$0x1]
    %v185 = vlaneseq
    %v186 = vshrl.u32 %v185, 7
    %v187 = vsub.s32 0, %v186
    %v188 = vrot.slane %v183, %v187
    %v192 = vunpack.c.l.b16 %v177
    %v193 = vunpack.c.l.b16 %v178
    %v194 = vpack.c.b16 %v193, %v192
    %v199 = vunpack.c.l.b16 %v179
    %v200 = vunpack.c.l.b16 %v180
    %v201 = vunpack.c.l.b16 %v181
    %v202 = vunpack.c.l.b16 %v182
    %v203 = vpack.c.b16 %v200, %v199
    %v204 = vpack.c.b16 %v202, %v201
    %v208 = vsel %vm132, %v194, 0
    %210 = vmatprep.subr.bf16.mxu0 0
    %211 = vmatpush1.bf16.msra.mxu0 %v203
    %212 = vmatprep.subr.bf16.mxu0 0
    %213 = vmatpush1.bf16.msra.mxu0 %v204
    %214 = vmatprep.subr.bf16.mxu0 0
    %215 = vmatpush1.bf16.msra.mxu0 0
    %216 = vmatprep.subr.bf16.mxu0 0
    %217 = vmatpush1.bf16.msra.mxu0 0
    %218 = vmatprep.subr.bf16.mxu0 0
    %219 = vmatpush1.bf16.msra.mxu0 0
    %220 = vmatprep.subr.bf16.mxu0 0
    %221 = vmatpush1.bf16.msra.mxu0 0
    %222 = vmatprep.subr.bf16.mxu0 0
    %223 = vmatpush1.bf16.msra.mxu0 0
    %224 = vmatprep.subr.bf16.mxu0 0
    %225 = vmatpush1.bf16.msra.mxu0 0
    %226 = vmatprep.subr.bf16.mxu0 0
    %227 = vmatpush1.bf16.msra.mxu0 0
    %228 = vmatprep.subr.bf16.mxu0 0
    %229 = vmatpush1.bf16.msra.mxu0 0
    %230 = vmatprep.subr.bf16.mxu0 0
    %231 = vmatpush1.bf16.msra.mxu0 0
    %232 = vmatprep.subr.bf16.mxu0 0
    %233 = vmatpush1.bf16.msra.mxu0 0
    %234 = vmatprep.subr.bf16.mxu0 0
    %235 = vmatpush1.bf16.msra.mxu0 0
    %236 = vmatprep.subr.bf16.mxu0 0
    %237 = vmatpush1.bf16.msra.mxu0 0
    %238 = vmatprep.subr.bf16.mxu0 0
    %239 = vmatpush1.bf16.msra.mxu0 0
    %240 = vmatprep.subr.bf16.mxu0 0
    %241 = vmatpush1.bf16.msra.mxu0 0
    %242 = vmatprep.mubr.bf16.mxu0 0
    %243 = vmatmul.mubr.bf16.gmra.mrb[0].mxu0 %v208
    %v244 = vpop.f32.mrb[0].mxu0
    %v245 = vadd.f32 %v188, %v244
    %v246 = vpop.f32.mrb[0].mxu0
    %v247 = vpop.f32.mrb[0].mxu0
    %v248 = vadd.f32 %v188, %v247
    %v249 = vpop.f32.mrb[0].mxu0
    %250 = vdwg.mxu0
    %v251 = vld [vmem:[#allocation7] sm:$0xf]
    %v252 = vld [vmem:[#allocation7 + $0x4] sm:$0xf]
    %v253 = vld [vmem:[%s5] sm:$0xf]
    %v254 = vld [vmem:[%s5 + $0x4] sm:$0xf]
    %v255 = vld [vmem:[%s5 + $0x8] sm:$0xf]
    %v256 = vld [vmem:[%s5 + $0xc] sm:$0xf]
    %v257 = vld [vmem:[%s8] sm:$0x1]
    %v259 = vlaneseq
    %v260 = vshrl.u32 %v259, 7
    %v261 = vsub.s32 0, %v260
    %v262 = vrot.slane %v257, %v261
    %v266 = vunpack.c.l.b16 %v251
    %v267 = vunpack.c.l.b16 %v252
    %v268 = vpack.c.b16 %v267, %v266
    %v273 = vunpack.c.l.b16 %v253
    %v274 = vunpack.c.l.b16 %v254
    %v275 = vunpack.c.l.b16 %v255
    %v276 = vunpack.c.l.b16 %v256
    %v277 = vpack.c.b16 %v274, %v273
    %v278 = vpack.c.b16 %v276, %v275
    %v282 = vsel %vm132, %v268, 0
    %284 = vmatprep.subr.bf16.mxu0 0
    %285 = vmatpush1.bf16.msra.mxu0 %v277
    %286 = vmatprep.subr.bf16.mxu0 0
    %287 = vmatpush1.bf16.msra.mxu0 %v278
    %288 = vmatprep.subr.bf16.mxu0 0
    %289 = vmatpush1.bf16.msra.mxu0 0
    %290 = vmatprep.subr.bf16.mxu0 0
    %291 = vmatpush1.bf16.msra.mxu0 0
    %292 = vmatprep.subr.bf16.mxu0 0
    %293 = vmatpush1.bf16.msra.mxu0 0
    %294 = vmatprep.subr.bf16.mxu0 0
    %295 = vmatpush1.bf16.msra.mxu0 0
    %296 = vmatprep.subr.bf16.mxu0 0
    %297 = vmatpush1.bf16.msra.mxu0 0
    %298 = vmatprep.subr.bf16.mxu0 0
    %299 = vmatpush1.bf16.msra.mxu0 0
    %300 = vmatprep.subr.bf16.mxu0 0
    %301 = vmatpush1.bf16.msra.mxu0 0
    %302 = vmatprep.subr.bf16.mxu0 0
    %303 = vmatpush1.bf16.msra.mxu0 0
    %304 = vmatprep.subr.bf16.mxu0 0
    %305 = vmatpush1.bf16.msra.mxu0 0
    %306 = vmatprep.subr.bf16.mxu0 0
    %307 = vmatpush1.bf16.msra.mxu0 0
    %308 = vmatprep.subr.bf16.mxu0 0
    %309 = vmatpush1.bf16.msra.mxu0 0
    %310 = vmatprep.subr.bf16.mxu0 0
    %311 = vmatpush1.bf16.msra.mxu0 0
    %312 = vmatprep.subr.bf16.mxu0 0
    %313 = vmatpush1.bf16.msra.mxu0 0
    %314 = vmatprep.subr.bf16.mxu0 0
    %315 = vmatpush1.bf16.msra.mxu0 0
    %316 = vmatprep.mubr.bf16.mxu0 0
    %317 = vmatmul.mubr.bf16.gmra.mrb[0].mxu0 %v282
    %v318 = vpop.f32.mrb[0].mxu0
    %v319 = vadd.f32 %v262, %v318
    %v320 = vpop.f32.mrb[0].mxu0
    %v321 = vpop.f32.mrb[0].mxu0
    %v322 = vadd.f32 %v262, %v321
    %v323 = vpop.f32.mrb[0].mxu0
    %324 = vdwg.mxu0
    %v325 = vpack.c.bf16 %v171, %v171
    %v326 = vpack.c.bf16 %v245, %v245
    %v327 = vpack.c.bf16 %v319, %v319
    %vm328 = vcmask 64512
    %v330 = vsel %vm328, %v325, 0
    %v333 = vsel %vm328, %v326, 0
    %335 = vmatprep.subr.bf16.mxu0 0
    %336 = vmatpush1.bf16.xpose.msra.mxu0 %v333
    %337 = vmatprep.subr.bf16.mxu0 0
    %338 = vmatpush1.bf16.xpose.msra.mxu0 0
    %339 = vmatprep.subr.bf16.mxu0 0
    %340 = vmatpush1.bf16.xpose.msra.mxu0 0
    %341 = vmatprep.subr.bf16.mxu0 0
    %342 = vmatpush1.bf16.xpose.msra.mxu0 0
    %343 = vmatprep.subr.bf16.mxu0 0
    %344 = vmatpush1.bf16.xpose.msra.mxu0 0
    %345 = vmatprep.subr.bf16.mxu0 0
    %346 = vmatpush1.bf16.xpose.msra.mxu0 0
    %347 = vmatprep.subr.bf16.mxu0 0
    %348 = vmatpush1.bf16.xpose.msra.mxu0 0
    %349 = vmatprep.subr.bf16.mxu0 0
    %350 = vmatpush1.bf16.xpose.msra.mxu0 0
    %351 = vmatprep.subr.bf16.mxu0 0
    %352 = vmatpush1.bf16.xpose.msra.mxu0 0
    %353 = vmatprep.subr.bf16.mxu0 0
    %354 = vmatpush1.bf16.xpose.msra.mxu0 0
    %355 = vmatprep.subr.bf16.mxu0 0
    %356 = vmatpush1.bf16.xpose.msra.mxu0 0
    %357 = vmatprep.subr.bf16.mxu0 0
    %358 = vmatpush1.bf16.xpose.msra.mxu0 0
    %359 = vmatprep.subr.bf16.mxu0 0
    %360 = vmatpush1.bf16.xpose.msra.mxu0 0
    %361 = vmatprep.subr.bf16.mxu0 0
    %362 = vmatpush1.bf16.xpose.msra.mxu0 0
    %363 = vmatprep.subr.bf16.mxu0 0
    %364 = vmatpush1.bf16.xpose.msra.mxu0 0
    %365 = vmatprep.subr.bf16.mxu0 0
    %366 = vmatpush1.bf16.xpose.msra.mxu0 0
    %367 = vmatprep.mubr.bf16.mxu0 0
    %368 = vmatmul.mubr.bf16.gmra.mrb[0].mxu0 %v330
    %v369 = vpop.f32.mrb[0].mxu0
    %v370 = vadd.f32 0.0, %v369
    %v371 = vpop.f32.mrb[0].mxu0
    %v372 = vpop.f32.mrb[0].mxu0
    %v373 = vpop.f32.mrb[0].mxu0
    %374 = vdwg.mxu0
    %v375 = vmul.f32 %v370, 0.35355338
    %v376 = vsel %vm328, %v375, -inf
    %377 = vmax.xlane.f32.xlu0 %v376
    %v378 = vpop.xlane.xlu0 %377
    %v379 = vsub.f32 %v375, %v378
    %v380 = vmul.f32 %v379, 1.442695
    %v381 = vpow.pop %v380
    %v382 = vsel %vm328, %v381, 0.0
    %383 = vadd.xlane.f32.xlu0 %v382
    %v384 = vpop.xlane.xlu0 %383
    %v385 = vrcp.pop %v384
    %v386 = vmul.f32 %v381, %v385
    %v387 = vpack.c.bf16 %v386, %v386
    %v389 = vsel %vm328, %v387, 0
    %vm391 = vcmask 1043456
    %v393 = vsel %vm391, %v327, 0
    %395 = vmatprep.subr.bf16.mxu0 0
    %396 = vmatpush1.bf16.msra.mxu0 %v393
    %397 = vmatprep.subr.bf16.mxu0 0
    %398 = vmatpush1.bf16.msra.mxu0 0
    %399 = vmatprep.subr.bf16.mxu0 0
    %400 = vmatpush1.bf16.msra.mxu0 0
    %401 = vmatprep.subr.bf16.mxu0 0
    %402 = vmatpush1.bf16.msra.mxu0 0
    %403 = vmatprep.subr.bf16.mxu0 0
    %404 = vmatpush1.bf16.msra.mxu0 0
    %405 = vmatprep.subr.bf16.mxu0 0
    %406 = vmatpush1.bf16.msra.mxu0 0
    %407 = vmatprep.subr.bf16.mxu0 0
    %408 = vmatpush1.bf16.msra.mxu0 0
    %409 = vmatprep.subr.bf16.mxu0 0
    %410 = vmatpush1.bf16.msra.mxu0 0
    %411 = vmatprep.subr.bf16.mxu0 0
    %412 = vmatpush1.bf16.msra.mxu0 0
    %413 = vmatprep.subr.bf16.mxu0 0
    %414 = vmatpush1.bf16.msra.mxu0 0
    %415 = vmatprep.subr.bf16.mxu0 0
    %416 = vmatpush1.bf16.msra.mxu0 0
    %417 = vmatprep.subr.bf16.mxu0 0
    %418 = vmatpush1.bf16.msra.mxu0 0
    %419 = vmatprep.subr.bf16.mxu0 0
    %420 = vmatpush1.bf16.msra.mxu0 0
    %421 = vmatprep.subr.bf16.mxu0 0
    %422 = vmatpush1.bf16.msra.mxu0 0
    %423 = vmatprep.subr.bf16.mxu0 0
    %424 = vmatpush1.bf16.msra.mxu0 0
    %425 = vmatprep.subr.bf16.mxu0 0
    %426 = vmatpush1.bf16.msra.mxu0 0
    %427 = vmatprep.mubr.bf16.mxu0 0
    %428 = vmatmul.mubr.bf16.gmra.mrb[0].mxu0 %v389
    %v429 = vpop.f32.mrb[0].mxu0
    %v430 = vadd.f32 0.0, %v429
    %v431 = vpop.f32.mrb[0].mxu0
    %v432 = vpop.f32.mrb[0].mxu0
    %v433 = vpop.f32.mrb[0].mxu0
    %434 = vdwg.mxu0
    %435 = vst.msk [vmem:[#allocation11] sm:$0xff] %vm328, %v430
    %437 = vrot.lane.b32.xlu0 %v325, 120
    %v438 = vpop.permute.xlu0 %437
    %440 = vrot.lane.b32.xlu0 %v326, 120
    %v441 = vpop.permute.xlu0 %440
    %v443 = vsel %vm328, %v438, 0
    %v446 = vsel %vm328, %v441, 0
    %448 = vmatprep.subr.bf16.mxu0 0
    %449 = vmatpush1.bf16.xpose.msra.mxu0 %v446
    %450 = vmatprep.subr.bf16.mxu0 0
    %451 = vmatpush1.bf16.xpose.msra.mxu0 0
    %452 = vmatprep.subr.bf16.mxu0 0
    %453 = vmatpush1.bf16.xpose.msra.mxu0 0
    %454 = vmatprep.subr.bf16.mxu0 0
    %455 = vmatpush1.bf16.xpose.msra.mxu0 0
    %456 = vmatprep.subr.bf16.mxu0 0
    %457 = vmatpush1.bf16.xpose.msra.mxu0 0
    %458 = vmatprep.subr.bf16.mxu0 0
    %459 = vmatpush1.bf16.xpose.msra.mxu0 0
    %460 = vmatprep.subr.bf16.mxu0 0
    %461 = vmatpush1.bf16.xpose.msra.mxu0 0
    %462 = vmatprep.subr.bf16.mxu0 0
    %463 = vmatpush1.bf16.xpose.msra.mxu0 0
    %464 = vmatprep.subr.bf16.mxu0 0
    %465 = vmatpush1.bf16.xpose.msra.mxu0 0
    %466 = vmatprep.subr.bf16.mxu0 0
    %467 = vmatpush1.bf16.xpose.msra.mxu0 0
    %468 = vmatprep.subr.bf16.mxu0 0
    %469 = vmatpush1.bf16.xpose.msra.mxu0 0
    %470 = vmatprep.subr.bf16.mxu0 0
    %471 = vmatpush1.bf16.xpose.msra.mxu0 0
    %472 = vmatprep.subr.bf16.mxu0 0
    %473 = vmatpush1.bf16.xpose.msra.mxu0 0
    %474 = vmatprep.subr.bf16.mxu0 0
    %475 = vmatpush1.bf16.xpose.msra.mxu0 0
    %476 = vmatprep.subr.bf16.mxu0 0
    %477 = vmatpush1.bf16.xpose.msra.mxu0 0
    %478 = vmatprep.subr.bf16.mxu0 0
    %479 = vmatpush1.bf16.xpose.msra.mxu0 0
    %480 = vmatprep.mubr.bf16.mxu0 0
    %481 = vmatmul.mubr.bf16.gmra.mrb[0].mxu0 %v443
    %v482 = vpop.f32.mrb[0].mxu0
    %v483 = vadd.f32 0.0, %v482
    %v484 = vpop.f32.mrb[0].mxu0
    %v485 = vpop.f32.mrb[0].mxu0
    %v486 = vpop.f32.mrb[0].mxu0
    %487 = vdwg.mxu0
    %v488 = vmul.f32 %v483, 0.35355338
    %v489 = vsel %vm328, %v488, -inf
    %490 = vmax.xlane.f32.xlu0 %v489
    %v491 = vpop.xlane.xlu0 %490
    %v492 = vsub.f32 %v488, %v491
    %v493 = vmul.f32 %v492, 1.442695
    %v494 = vpow.pop %v493
    %v495 = vsel %vm328, %v494, 0.0
    %496 = vadd.xlane.f32.xlu0 %v495
    %v497 = vpop.xlane.xlu0 %496
    %v498 = vrcp.pop %v497
    %v499 = vmul.f32 %v494, %v498
    %v500 = vpack.c.bf16 %v499, %v499
    %502 = vrot.lane.b32.xlu0 %v327, 120
    %v503 = vpop.permute.xlu0 %502
    %v505 = vsel %vm328, %v500, 0
    %v508 = vsel %vm391, %v503, 0
    %510 = vmatprep.subr.bf16.mxu0 0
    %511 = vmatpush1.bf16.msra.mxu0 %v508
    %512 = vmatprep.subr.bf16.mxu0 0
    %513 = vmatpush1.bf16.msra.mxu0 0
    %514 = vmatprep.subr.bf16.mxu0 0
    %515 = vmatpush1.bf16.msra.mxu0 0
    %516 = vmatprep.subr.bf16.mxu0 0
    %517 = vmatpush1.bf16.msra.mxu0 0
    %518 = vmatprep.subr.bf16.mxu0 0
    %519 = vmatpush1.bf16.msra.mxu0 0
    %520 = vmatprep.subr.bf16.mxu0 0
    %521 = vmatpush1.bf16.msra.mxu0 0
    %522 = vmatprep.subr.bf16.mxu0 0
    %523 = vmatpush1.bf16.msra.mxu0 0
    %524 = vmatprep.subr.bf16.mxu0 0
    %525 = vmatpush1.bf16.msra.mxu0 0
    %526 = vmatprep.subr.bf16.mxu0 0
    %527 = vmatpush1.bf16.msra.mxu0 0
    %528 = vmatprep.subr.bf16.mxu0 0
    %529 = vmatpush1.bf16.msra.mxu0 0
    %530 = vmatprep.subr.bf16.mxu0 0
    %531 = vmatpush1.bf16.msra.mxu0 0
    %532 = vmatprep.subr.bf16.mxu0 0
    %533 = vmatpush1.bf16.msra.mxu0 0
    %534 = vmatprep.subr.bf16.mxu0 0
    %535 = vmatpush1.bf16.msra.mxu0 0
    %536 = vmatprep.subr.bf16.mxu0 0
    %537 = vmatpush1.bf16.msra.mxu0 0
    %538 = vmatprep.subr.bf16.mxu0 0
    %539 = vmatpush1.bf16.msra.mxu0 0
    %540 = vmatprep.subr.bf16.mxu0 0
    %541 = vmatpush1.bf16.msra.mxu0 0
    %542 = vmatprep.mubr.bf16.mxu0 0
    %543 = vmatmul.mubr.bf16.gmra.mrb[0].mxu0 %v505
    %v544 = vpop.f32.mrb[0].mxu0
    %v545 = vadd.f32 0.0, %v544
    %v546 = vpop.f32.mrb[0].mxu0
    %v547 = vpop.f32.mrb[0].mxu0
    %v548 = vpop.f32.mrb[0].mxu0
    %549 = vdwg.mxu0
    %551 = vrot.lane.b32.xlu0 %v545, 8
    %v552 = vpop.permute.xlu0 %551
    %vm554 = vcmask 130112
    %555 = vst.msk [vmem:[#allocation11] sm:$0xff] %vm554, %v552
    %556 = vrot.lane.b32.xlu0 %v325, 112
    %v557 = vpop.permute.xlu0 %556
    %558 = vrot.lane.b32.xlu0 %v326, 112
    %v559 = vpop.permute.xlu0 %558
    %v561 = vsel %vm328, %v557, 0
    %v564 = vsel %vm328, %v559, 0
    %566 = vmatprep.subr.bf16.mxu0 0
    %567 = vmatpush1.bf16.xpose.msra.mxu0 %v564
    %568 = vmatprep.subr.bf16.mxu0 0
    %569 = vmatpush1.bf16.xpose.msra.mxu0 0
    %570 = vmatprep.subr.bf16.mxu0 0
    %571 = vmatpush1.bf16.xpose.msra.mxu0 0
    %572 = vmatprep.subr.bf16.mxu0 0
    %573 = vmatpush1.bf16.xpose.msra.mxu0 0
    %574 = vmatprep.subr.bf16.mxu0 0
    %575 = vmatpush1.bf16.xpose.msra.mxu0 0
    %576 = vmatprep.subr.bf16.mxu0 0
    %577 = vmatpush1.bf16.xpose.msra.mxu0 0
    %578 = vmatprep.subr.bf16.mxu0 0
    %579 = vmatpush1.bf16.xpose.msra.mxu0 0
    %580 = vmatprep.subr.bf16.mxu0 0
    %581 = vmatpush1.bf16.xpose.msra.mxu0 0
    %582 = vmatprep.subr.bf16.mxu0 0
    %583 = vmatpush1.bf16.xpose.msra.mxu0 0
    %584 = vmatprep.subr.bf16.mxu0 0
    %585 = vmatpush1.bf16.xpose.msra.mxu0 0
    %586 = vmatprep.subr.bf16.mxu0 0
    %587 = vmatpush1.bf16.xpose.msra.mxu0 0
    %588 = vmatprep.subr.bf16.mxu0 0
    %589 = vmatpush1.bf16.xpose.msra.mxu0 0
    %590 = vmatprep.subr.bf16.mxu0 0
    %591 = vmatpush1.bf16.xpose.msra.mxu0 0
    %592 = vmatprep.subr.bf16.mxu0 0
    %593 = vmatpush1.bf16.xpose.msra.mxu0 0
    %594 = vmatprep.subr.bf16.mxu0 0
    %595 = vmatpush1.bf16.xpose.msra.mxu0 0
    %596 = vmatprep.subr.bf16.mxu0 0
    %597 = vmatpush1.bf16.xpose.msra.mxu0 0
    %598 = vmatprep.mubr.bf16.mxu0 0
    %599 = vmatmul.mubr.bf16.gmra.mrb[0].mxu0 %v561
    %v600 = vpop.f32.mrb[0].mxu0
    %v601 = vadd.f32 0.0, %v600
    %v602 = vpop.f32.mrb[0].mxu0
    %v603 = vpop.f32.mrb[0].mxu0
    %v604 = vpop.f32.mrb[0].mxu0
    %605 = vdwg.mxu0
    %v606 = vmul.f32 %v601, 0.35355338
    %v607 = vsel %vm328, %v606, -inf
    %608 = vmax.xlane.f32.xlu0 %v607
    %v609 = vpop.xlane.xlu0 %608
    %v610 = vsub.f32 %v606, %v609
    %v611 = vmul.f32 %v610, 1.442695
    %v612 = vpow.pop %v611
    %v613 = vsel %vm328, %v612, 0.0
    %614 = vadd.xlane.f32.xlu0 %v613
    %v615 = vpop.xlane.xlu0 %614
    %v616 = vrcp.pop %v615
    %v617 = vmul.f32 %v612, %v616
    %v618 = vpack.c.bf16 %v617, %v617
    %619 = vrot.lane.b32.xlu0 %v327, 112
    %v620 = vpop.permute.xlu0 %619
    %v622 = vsel %vm328, %v618, 0
    %v625 = vsel %vm391, %v620, 0
    %627 = vmatprep.subr.bf16.mxu0 0
    %628 = vmatpush1.bf16.msra.mxu0 %v625
    %629 = vmatprep.subr.bf16.mxu0 0
    %630 = vmatpush1.bf16.msra.mxu0 0
    %631 = vmatprep.subr.bf16.mxu0 0
    %632 = vmatpush1.bf16.msra.mxu0 0
    %633 = vmatprep.subr.bf16.mxu0 0
    %634 = vmatpush1.bf16.msra.mxu0 0
    %635 = vmatprep.subr.bf16.mxu0 0
    %636 = vmatpush1.bf16.msra.mxu0 0
    %637 = vmatprep.subr.bf16.mxu0 0
    %638 = vmatpush1.bf16.msra.mxu0 0
    %639 = vmatprep.subr.bf16.mxu0 0
    %640 = vmatpush1.bf16.msra.mxu0 0
    %641 = vmatprep.subr.bf16.mxu0 0
    %642 = vmatpush1.bf16.msra.mxu0 0
    %643 = vmatprep.subr.bf16.mxu0 0
    %644 = vmatpush1.bf16.msra.mxu0 0
    %645 = vmatprep.subr.bf16.mxu0 0
    %646 = vmatpush1.bf16.msra.mxu0 0
    %647 = vmatprep.subr.bf16.mxu0 0
    %648 = vmatpush1.bf16.msra.mxu0 0
    %649 = vmatprep.subr.bf16.mxu0 0
    %650 = vmatpush1.bf16.msra.mxu0 0
    %651 = vmatprep.subr.bf16.mxu0 0
    %652 = vmatpush1.bf16.msra.mxu0 0
    %653 = vmatprep.subr.bf16.mxu0 0
    %654 = vmatpush1.bf16.msra.mxu0 0
    %655 = vmatprep.subr.bf16.mxu0 0
    %656 = vmatpush1.bf16.msra.mxu0 0
    %657 = vmatprep.subr.bf16.mxu0 0
    %658 = vmatpush1.bf16.msra.mxu0 0
    %659 = vmatprep.mubr.bf16.mxu0 0
    %660 = vmatmul.mubr.bf16.gmra.mrb[0].mxu0 %v622
    %v661 = vpop.f32.mrb[0].mxu0
    %v662 = vadd.f32 0.0, %v661
    %v663 = vpop.f32.mrb[0].mxu0
    %v664 = vpop.f32.mrb[0].mxu0
    %v665 = vpop.f32.mrb[0].mxu0
    %666 = vdwg.mxu0
    %668 = vrot.lane.b32.xlu0 %v662, 16
    %v669 = vpop.permute.xlu0 %668
    %vm671 = vcmask 195712
    %672 = vst.msk [vmem:[#allocation11] sm:$0xff] %vm671, %v669
    %673 = vrot.lane.b32.xlu0 %v325, 104
    %v674 = vpop.permute.xlu0 %673
    %675 = vrot.lane.b32.xlu0 %v326, 104
    %v676 = vpop.permute.xlu0 %675
    %v678 = vsel %vm328, %v674, 0
    %v681 = vsel %vm328, %v676, 0
    %683 = vmatprep.subr.bf16.mxu0 0
    %684 = vmatpush1.bf16.xpose.msra.mxu0 %v681
    %685 = vmatprep.subr.bf16.mxu0 0
    %686 = vmatpush1.bf16.xpose.msra.mxu0 0
    %687 = vmatprep.subr.bf16.mxu0 0
    %688 = vmatpush1.bf16.xpose.msra.mxu0 0
    %689 = vmatprep.subr.bf16.mxu0 0
    %690 = vmatpush1.bf16.xpose.msra.mxu0 0
    %691 = vmatprep.subr.bf16.mxu0 0
    %692 = vmatpush1.bf16.xpose.msra.mxu0 0
    %693 = vmatprep.subr.bf16.mxu0 0
    %694 = vmatpush1.bf16.xpose.msra.mxu0 0
    %695 = vmatprep.subr.bf16.mxu0 0
    %696 = vmatpush1.bf16.xpose.msra.mxu0 0
    %697 = vmatprep.subr.bf16.mxu0 0
    %698 = vmatpush1.bf16.xpose.msra.mxu0 0
    %699 = vmatprep.subr.bf16.mxu0 0
    %700 = vmatpush1.bf16.xpose.msra.mxu0 0
    %701 = vmatprep.subr.bf16.mxu0 0
    %702 = vmatpush1.bf16.xpose.msra.mxu0 0
    %703 = vmatprep.subr.bf16.mxu0 0
    %704 = vmatpush1.bf16.xpose.msra.mxu0 0
    %705 = vmatprep.subr.bf16.mxu0 0
    %706 = vmatpush1.bf16.xpose.msra.mxu0 0
    %707 = vmatprep.subr.bf16.mxu0 0
    %708 = vmatpush1.bf16.xpose.msra.mxu0 0
    %709 = vmatprep.subr.bf16.mxu0 0
    %710 = vmatpush1.bf16.xpose.msra.mxu0 0
    %711 = vmatprep.subr.bf16.mxu0 0
    %712 = vmatpush1.bf16.xpose.msra.mxu0 0
    %713 = vmatprep.subr.bf16.mxu0 0
    %714 = vmatpush1.bf16.xpose.msra.mxu0 0
    %715 = vmatprep.mubr.bf16.mxu0 0
    %716 = vmatmul.mubr.bf16.gmra.mrb[0].mxu0 %v678
    %v717 = vpop.f32.mrb[0].mxu0
    %v718 = vadd.f32 0.0, %v717
    %v719 = vpop.f32.mrb[0].mxu0
    %v720 = vpop.f32.mrb[0].mxu0
    %v721 = vpop.f32.mrb[0].mxu0
    %722 = vdwg.mxu0
    %v723 = vmul.f32 %v718, 0.35355338
    %v724 = vsel %vm328, %v723, -inf
    %725 = vmax.xlane.f32.xlu0 %v724
    %v726 = vpop.xlane.xlu0 %725
    %v727 = vsub.f32 %v723, %v726
    %v728 = vmul.f32 %v727, 1.442695
    %v729 = vpow.pop %v728
    %v730 = vsel %vm328, %v729, 0.0
    %731 = vadd.xlane.f32.xlu0 %v730
    %v732 = vpop.xlane.xlu0 %731
    %v733 = vrcp.pop %v732
    %v734 = vmul.f32 %v729, %v733
    %v735 = vpack.c.bf16 %v734, %v734
    %736 = vrot.lane.b32.xlu0 %v327, 104
    %v737 = vpop.permute.xlu0 %736
    %v739 = vsel %vm328, %v735, 0
    %v742 = vsel %vm391, %v737, 0
    %744 = vmatprep.subr.bf16.mxu0 0
    %745 = vmatpush1.bf16.msra.mxu0 %v742
    %746 = vmatprep.subr.bf16.mxu0 0
    %747 = vmatpush1.bf16.msra.mxu0 0
    %748 = vmatprep.subr.bf16.mxu0 0
    %749 = vmatpush1.bf16.msra.mxu0 0
    %750 = vmatprep.subr.bf16.mxu0 0
    %751 = vmatpush1.bf16.msra.mxu0 0
    %752 = vmatprep.subr.bf16.mxu0 0
    %753 = vmatpush1.bf16.msra.mxu0 0
    %754 = vmatprep.subr.bf16.mxu0 0
    %755 = vmatpush1.bf16.msra.mxu0 0
    %756 = vmatprep.subr.bf16.mxu0 0
    %757 = vmatpush1.bf16.msra.mxu0 0
    %758 = vmatprep.subr.bf16.mxu0 0
    %759 = vmatpush1.bf16.msra.mxu0 0
    %760 = vmatprep.subr.bf16.mxu0 0
    %761 = vmatpush1.bf16.msra.mxu0 0
    %762 = vmatprep.subr.bf16.mxu0 0
    %763 = vmatpush1.bf16.msra.mxu0 0
    %764 = vmatprep.subr.bf16.mxu0 0
    %765 = vmatpush1.bf16.msra.mxu0 0
    %766 = vmatprep.subr.bf16.mxu0 0
    %767 = vmatpush1.bf16.msra.mxu0 0
    %768 = vmatprep.subr.bf16.mxu0 0
    %769 = vmatpush1.bf16.msra.mxu0 0
    %770 = vmatprep.subr.bf16.mxu0 0
    %771 = vmatpush1.bf16.msra.mxu0 0
    %772 = vmatprep.subr.bf16.mxu0 0
    %773 = vmatpush1.bf16.msra.mxu0 0
    %774 = vmatprep.subr.bf16.mxu0 0
    %775 = vmatpush1.bf16.msra.mxu0 0
    %776 = vmatprep.mubr.bf16.mxu0 0
    %777 = vmatmul.mubr.bf16.gmra.mrb[0].mxu0 %v739
    %v778 = vpop.f32.mrb[0].mxu0
    %v779 = vadd.f32 0.0, %v778
    %v780 = vpop.f32.mrb[0].mxu0
    %v781 = vpop.f32.mrb[0].mxu0
    %v782 = vpop.f32.mrb[0].mxu0
    %783 = vdwg.mxu0
    %785 = vrot.lane.b32.xlu0 %v779, 24
    %v786 = vpop.permute.xlu0 %785
    %vm788 = vcmask 261312
    %789 = vst.msk [vmem:[#allocation11] sm:$0xff] %vm788, %v786
    %v790 = vpack.c.bf16 %v174, %v174
    %v791 = vpack.c.bf16 %v248, %v248
    %v792 = vpack.c.bf16 %v322, %v322
    %v794 = vsel %vm328, %v790, 0
    %v797 = vsel %vm328, %v791, 0
    %799 = vmatprep.subr.bf16.mxu0 0
    %800 = vmatpush1.bf16.xpose.msra.mxu0 %v797
    %801 = vmatprep.subr.bf16.mxu0 0
    %802 = vmatpush1.bf16.xpose.msra.mxu0 0
    %803 = vmatprep.subr.bf16.mxu0 0
    %804 = vmatpush1.bf16.xpose.msra.mxu0 0
    %805 = vmatprep.subr.bf16.mxu0 0
    %806 = vmatpush1.bf16.xpose.msra.mxu0 0
    %807 = vmatprep.subr.bf16.mxu0 0
    %808 = vmatpush1.bf16.xpose.msra.mxu0 0
    %809 = vmatprep.subr.bf16.mxu0 0
    %810 = vmatpush1.bf16.xpose.msra.mxu0 0
    %811 = vmatprep.subr.bf16.mxu0 0
    %812 = vmatpush1.bf16.xpose.msra.mxu0 0
    %813 = vmatprep.subr.bf16.mxu0 0
    %814 = vmatpush1.bf16.xpose.msra.mxu0 0
    %815 = vmatprep.subr.bf16.mxu0 0
    %816 = vmatpush1.bf16.xpose.msra.mxu0 0
    %817 = vmatprep.subr.bf16.mxu0 0
    %818 = vmatpush1.bf16.xpose.msra.mxu0 0
    %819 = vmatprep.subr.bf16.mxu0 0
    %820 = vmatpush1.bf16.xpose.msra.mxu0 0
    %821 = vmatprep.subr.bf16.mxu0 0
    %822 = vmatpush1.bf16.xpose.msra.mxu0 0
    %823 = vmatprep.subr.bf16.mxu0 0
    %824 = vmatpush1.bf16.xpose.msra.mxu0 0
    %825 = vmatprep.subr.bf16.mxu0 0
    %826 = vmatpush1.bf16.xpose.msra.mxu0 0
    %827 = vmatprep.subr.bf16.mxu0 0
    %828 = vmatpush1.bf16.xpose.msra.mxu0 0
    %829 = vmatprep.subr.bf16.mxu0 0
    %830 = vmatpush1.bf16.xpose.msra.mxu0 0
    %831 = vmatprep.mubr.bf16.mxu0 0
    %832 = vmatmul.mubr.bf16.gmra.mrb[0].mxu0 %v794
    %v833 = vpop.f32.mrb[0].mxu0
    %v834 = vadd.f32 0.0, %v833
    %v835 = vpop.f32.mrb[0].mxu0
    %v836 = vpop.f32.mrb[0].mxu0
    %v837 = vpop.f32.mrb[0].mxu0
    %838 = vdwg.mxu0
    %v839 = vmul.f32 %v834, 0.35355338
    %v840 = vsel %vm328, %v839, -inf
    %841 = vmax.xlane.f32.xlu0 %v840
    %v842 = vpop.xlane.xlu0 %841
    %v843 = vsub.f32 %v839, %v842
    %v844 = vmul.f32 %v843, 1.442695
    %v845 = vpow.pop %v844
    %v846 = vsel %vm328, %v845, 0.0
    %847 = vadd.xlane.f32.xlu0 %v846
    %v848 = vpop.xlane.xlu0 %847
    %v849 = vrcp.pop %v848
    %v850 = vmul.f32 %v845, %v849
    %v851 = vpack.c.bf16 %v850, %v850
    %v853 = vsel %vm328, %v851, 0
    %v856 = vsel %vm391, %v792, 0
    %858 = vmatprep.subr.bf16.mxu0 0
    %859 = vmatpush1.bf16.msra.mxu0 %v856
    %860 = vmatprep.subr.bf16.mxu0 0
    %861 = vmatpush1.bf16.msra.mxu0 0
    %862 = vmatprep.subr.bf16.mxu0 0
    %863 = vmatpush1.bf16.msra.mxu0 0
    %864 = vmatprep.subr.bf16.mxu0 0
    %865 = vmatpush1.bf16.msra.mxu0 0
    %866 = vmatprep.subr.bf16.mxu0 0
    %867 = vmatpush1.bf16.msra.mxu0 0
    %868 = vmatprep.subr.bf16.mxu0 0
    %869 = vmatpush1.bf16.msra.mxu0 0
    %870 = vmatprep.subr.bf16.mxu0 0
    %871 = vmatpush1.bf16.msra.mxu0 0
    %872 = vmatprep.subr.bf16.mxu0 0
    %873 = vmatpush1.bf16.msra.mxu0 0
    %874 = vmatprep.subr.bf16.mxu0 0
    %875 = vmatpush1.bf16.msra.mxu0 0
    %876 = vmatprep.subr.bf16.mxu0 0
    %877 = vmatpush1.bf16.msra.mxu0 0
    %878 = vmatprep.subr.bf16.mxu0 0
    %879 = vmatpush1.bf16.msra.mxu0 0
    %880 = vmatprep.subr.bf16.mxu0 0
    %881 = vmatpush1.bf16.msra.mxu0 0
    %882 = vmatprep.subr.bf16.mxu0 0
    %883 = vmatpush1.bf16.msra.mxu0 0
    %884 = vmatprep.subr.bf16.mxu0 0
    %885 = vmatpush1.bf16.msra.mxu0 0
    %886 = vmatprep.subr.bf16.mxu0 0
    %887 = vmatpush1.bf16.msra.mxu0 0
    %888 = vmatprep.subr.bf16.mxu0 0
    %889 = vmatpush1.bf16.msra.mxu0 0
    %890 = vmatprep.mubr.bf16.mxu0 0
    %891 = vmatmul.mubr.bf16.gmra.mrb[0].mxu0 %v853
    %v892 = vpop.f32.mrb[0].mxu0
    %v893 = vadd.f32 0.0, %v892
    %v894 = vpop.f32.mrb[0].mxu0
    %v895 = vpop.f32.mrb[0].mxu0
    %v896 = vpop.f32.mrb[0].mxu0
    %897 = vdwg.mxu0
    %898 = vst.msk [vmem:[#allocation11 + $0x8] sm:$0xff] %vm328, %v893
    %900 = vrot.lane.b32.xlu0 %v790, 120
    %v901 = vpop.permute.xlu0 %900
    %903 = vrot.lane.b32.xlu0 %v791, 120
    %v904 = vpop.permute.xlu0 %903
    %v906 = vsel %vm328, %v901, 0
    %v909 = vsel %vm328, %v904, 0
    %911 = vmatprep.subr.bf16.mxu0 0
    %912 = vmatpush1.bf16.xpose.msra.mxu0 %v909
    %913 = vmatprep.subr.bf16.mxu0 0
    %914 = vmatpush1.bf16.xpose.msra.mxu0 0
    %915 = vmatprep.subr.bf16.mxu0 0
    %916 = vmatpush1.bf16.xpose.msra.mxu0 0
    %917 = vmatprep.subr.bf16.mxu0 0
    %918 = vmatpush1.bf16.xpose.msra.mxu0 0
    %919 = vmatprep.subr.bf16.mxu0 0
    %920 = vmatpush1.bf16.xpose.msra.mxu0 0
    %921 = vmatprep.subr.bf16.mxu0 0
    %922 = vmatpush1.bf16.xpose.msra.mxu0 0
    %923 = vmatprep.subr.bf16.mxu0 0
    %924 = vmatpush1.bf16.xpose.msra.mxu0 0
    %925 = vmatprep.subr.bf16.mxu0 0
    %926 = vmatpush1.bf16.xpose.msra.mxu0 0
    %927 = vmatprep.subr.bf16.mxu0 0
    %928 = vmatpush1.bf16.xpose.msra.mxu0 0
    %929 = vmatprep.subr.bf16.mxu0 0
    %930 = vmatpush1.bf16.xpose.msra.mxu0 0
    %931 = vmatprep.subr.bf16.mxu0 0
    %932 = vmatpush1.bf16.xpose.msra.mxu0 0
    %933 = vmatprep.subr.bf16.mxu0 0
    %934 = vmatpush1.bf16.xpose.msra.mxu0 0
    %935 = vmatprep.subr.bf16.mxu0 0
    %936 = vmatpush1.bf16.xpose.msra.mxu0 0
    %937 = vmatprep.subr.bf16.mxu0 0
    %938 = vmatpush1.bf16.xpose.msra.mxu0 0
    %939 = vmatprep.subr.bf16.mxu0 0
    %940 = vmatpush1.bf16.xpose.msra.mxu0 0
    %941 = vmatprep.subr.bf16.mxu0 0
    %942 = vmatpush1.bf16.xpose.msra.mxu0 0
    %943 = vmatprep.mubr.bf16.mxu0 0
    %944 = vmatmul.mubr.bf16.gmra.mrb[0].mxu0 %v906
    %v945 = vpop.f32.mrb[0].mxu0
    %v946 = vadd.f32 0.0, %v945
    %v947 = vpop.f32.mrb[0].mxu0
    %v948 = vpop.f32.mrb[0].mxu0
    %v949 = vpop.f32.mrb[0].mxu0
    %950 = vdwg.mxu0
    %v951 = vmul.f32 %v946, 0.35355338
    %v952 = vsel %vm328, %v951, -inf
    %953 = vmax.xlane.f32.xlu0 %v952
    %v954 = vpop.xlane.xlu0 %953
    %v955 = vsub.f32 %v951, %v954
    %v956 = vmul.f32 %v955, 1.442695
    %v957 = vpow.pop %v956
    %v958 = vsel %vm328, %v957, 0.0
    %959 = vadd.xlane.f32.xlu0 %v958
    %v960 = vpop.xlane.xlu0 %959
    %v961 = vrcp.pop %v960
    %v962 = vmul.f32 %v957, %v961
    %v963 = vpack.c.bf16 %v962, %v962
    %965 = vrot.lane.b32.xlu0 %v792, 120
    %v966 = vpop.permute.xlu0 %965
    %v968 = vsel %vm328, %v963, 0
    %v971 = vsel %vm391, %v966, 0
    %973 = vmatprep.subr.bf16.mxu0 0
    %974 = vmatpush1.bf16.msra.mxu0 %v971
    %975 = vmatprep.subr.bf16.mxu0 0
    %976 = vmatpush1.bf16.msra.mxu0 0
    %977 = vmatprep.subr.bf16.mxu0 0
    %978 = vmatpush1.bf16.msra.mxu0 0
    %979 = vmatprep.subr.bf16.mxu0 0
    %980 = vmatpush1.bf16.msra.mxu0 0
    %981 = vmatprep.subr.bf16.mxu0 0
    %982 = vmatpush1.bf16.msra.mxu0 0
    %983 = vmatprep.subr.bf16.mxu0 0
    %984 = vmatpush1.bf16.msra.mxu0 0
    %985 = vmatprep.subr.bf16.mxu0 0
    %986 = vmatpush1.bf16.msra.mxu0 0
    %987 = vmatprep.subr.bf16.mxu0 0
    %988 = vmatpush1.bf16.msra.mxu0 0
    %989 = vmatprep.subr.bf16.mxu0 0
    %990 = vmatpush1.bf16.msra.mxu0 0
    %991 = vmatprep.subr.bf16.mxu0 0
    %992 = vmatpush1.bf16.msra.mxu0 0
    %993 = vmatprep.subr.bf16.mxu0 0
    %994 = vmatpush1.bf16.msra.mxu0 0
    %995 = vmatprep.subr.bf16.mxu0 0
    %996 = vmatpush1.bf16.msra.mxu0 0
    %997 = vmatprep.subr.bf16.mxu0 0
    %998 = vmatpush1.bf16.msra.mxu0 0
    %999 = vmatprep.subr.bf16.mxu0 0
    %1000 = vmatpush1.bf16.msra.mxu0 0
    %1001 = vmatprep.subr.bf16.mxu0 0
    %1002 = vmatpush1.bf16.msra.mxu0 0
    %1003 = vmatprep.subr.bf16.mxu0 0
    %1004 = vmatpush1.bf16.msra.mxu0 0
    %1005 = vmatprep.mubr.bf16.mxu0 0
    %1006 = vmatmul.mubr.bf16.gmra.mrb[0].mxu0 %v968
    %v1007 = vpop.f32.mrb[0].mxu0
    %v1008 = vadd.f32 0.0, %v1007
    %v1009 = vpop.f32.mrb[0].mxu0
    %v1010 = vpop.f32.mrb[0].mxu0
    %v1011 = vpop.f32.mrb[0].mxu0
    %1012 = vdwg.mxu0
    %1014 = vrot.lane.b32.xlu0 %v1008, 8
    %v1015 = vpop.permute.xlu0 %1014
    %1017 = vst.msk [vmem:[#allocation11 + $0x8] sm:$0xff] %vm554, %v1015
    %1018 = vrot.lane.b32.xlu0 %v790, 112
    %v1019 = vpop.permute.xlu0 %1018
    %1020 = vrot.lane.b32.xlu0 %v791, 112
    %v1021 = vpop.permute.xlu0 %1020
    %v1023 = vsel %vm328, %v1019, 0
    %v1026 = vsel %vm328, %v1021, 0
    %1028 = vmatprep.subr.bf16.mxu0 0
    %1029 = vmatpush1.bf16.xpose.msra.mxu0 %v1026
    %1030 = vmatprep.subr.bf16.mxu0 0
    %1031 = vmatpush1.bf16.xpose.msra.mxu0 0
    %1032 = vmatprep.subr.bf16.mxu0 0
    %1033 = vmatpush1.bf16.xpose.msra.mxu0 0
    %1034 = vmatprep.subr.bf16.mxu0 0
    %1035 = vmatpush1.bf16.xpose.msra.mxu0 0
    %1036 = vmatprep.subr.bf16.mxu0 0
    %1037 = vmatpush1.bf16.xpose.msra.mxu0 0
    %1038 = vmatprep.subr.bf16.mxu0 0
    %1039 = vmatpush1.bf16.xpose.msra.mxu0 0
    %1040 = vmatprep.subr.bf16.mxu0 0
    %1041 = vmatpush1.bf16.xpose.msra.mxu0 0
    %1042 = vmatprep.subr.bf16.mxu0 0
    %1043 = vmatpush1.bf16.xpose.msra.mxu0 0
    %1044 = vmatprep.subr.bf16.mxu0 0
    %1045 = vmatpush1.bf16.xpose.msra.mxu0 0
    %1046 = vmatprep.subr.bf16.mxu0 0
    %1047 = vmatpush1.bf16.xpose.msra.mxu0 0
    %1048 = vmatprep.subr.bf16.mxu0 0
    %1049 = vmatpush1.bf16.xpose.msra.mxu0 0
    %1050 = vmatprep.subr.bf16.mxu0 0
    %1051 = vmatpush1.bf16.xpose.msra.mxu0 0
    %1052 = vmatprep.subr.bf16.mxu0 0
    %1053 = vmatpush1.bf16.xpose.msra.mxu0 0
    %1054 = vmatprep.subr.bf16.mxu0 0
    %1055 = vmatpush1.bf16.xpose.msra.mxu0 0
    %1056 = vmatprep.subr.bf16.mxu0 0
    %1057 = vmatpush1.bf16.xpose.msra.mxu0 0
    %1058 = vmatprep.subr.bf16.mxu0 0
    %1059 = vmatpush1.bf16.xpose.msra.mxu0 0
    %1060 = vmatprep.mubr.bf16.mxu0 0
    %1061 = vmatmul.mubr.bf16.gmra.mrb[0].mxu0 %v1023
    %v1062 = vpop.f32.mrb[0].mxu0
    %v1063 = vadd.f32 0.0, %v1062
    %v1064 = vpop.f32.mrb[0].mxu0
    %v1065 = vpop.f32.mrb[0].mxu0
    %v1066 = vpop.f32.mrb[0].mxu0
    %1067 = vdwg.mxu0
    %v1068 = vmul.f32 %v1063, 0.35355338
    %v1069 = vsel %vm328, %v1068, -inf
    %1070 = vmax.xlane.f32.xlu0 %v1069
    %v1071 = vpop.xlane.xlu0 %1070
    %v1072 = vsub.f32 %v1068, %v1071
    %v1073 = vmul.f32 %v1072, 1.442695
    %v1074 = vpow.pop %v1073
    %v1075 = vsel %vm328, %v1074, 0.0
    %1076 = vadd.xlane.f32.xlu0 %v1075
    %v1077 = vpop.xlane.xlu0 %1076
    %v1078 = vrcp.pop %v1077
    %v1079 = vmul.f32 %v1074, %v1078
    %v1080 = vpack.c.bf16 %v1079, %v1079
    %1081 = vrot.lane.b32.xlu0 %v792, 112
    %v1082 = vpop.permute.xlu0 %1081
    %v1084 = vsel %vm328, %v1080, 0
    %v1087 = vsel %vm391, %v1082, 0
    %1089 = vmatprep.subr.bf16.mxu0 0
    %1090 = vmatpush1.bf16.msra.mxu0 %v1087
    %1091 = vmatprep.subr.bf16.mxu0 0
    %1092 = vmatpush1.bf16.msra.mxu0 0
    %1093 = vmatprep.subr.bf16.mxu0 0
    %1094 = vmatpush1.bf16.msra.mxu0 0
    %1095 = vmatprep.subr.bf16.mxu0 0
    %1096 = vmatpush1.bf16.msra.mxu0 0
    %1097 = vmatprep.subr.bf16.mxu0 0
    %1098 = vmatpush1.bf16.msra.mxu0 0
    %1099 = vmatprep.subr.bf16.mxu0 0
    %1100 = vmatpush1.bf16.msra.mxu0 0
    %1101 = vmatprep.subr.bf16.mxu0 0
    %1102 = vmatpush1.bf16.msra.mxu0 0
    %1103 = vmatprep.subr.bf16.mxu0 0
    %1104 = vmatpush1.bf16.msra.mxu0 0
    %1105 = vmatprep.subr.bf16.mxu0 0
    %1106 = vmatpush1.bf16.msra.mxu0 0
    %1107 = vmatprep.subr.bf16.mxu0 0
    %1108 = vmatpush1.bf16.msra.mxu0 0
    %1109 = vmatprep.subr.bf16.mxu0 0
    %1110 = vmatpush1.bf16.msra.mxu0 0
    %1111 = vmatprep.subr.bf16.mxu0 0
    %1112 = vmatpush1.bf16.msra.mxu0 0
    %1113 = vmatprep.subr.bf16.mxu0 0
    %1114 = vmatpush1.bf16.msra.mxu0 0
    %1115 = vmatprep.subr.bf16.mxu0 0
    %1116 = vmatpush1.bf16.msra.mxu0 0
    %1117 = vmatprep.subr.bf16.mxu0 0
    %1118 = vmatpush1.bf16.msra.mxu0 0
    %1119 = vmatprep.subr.bf16.mxu0 0
    %1120 = vmatpush1.bf16.msra.mxu0 0
    %1121 = vmatprep.mubr.bf16.mxu0 0
    %1122 = vmatmul.mubr.bf16.gmra.mrb[0].mxu0 %v1084
    %v1123 = vpop.f32.mrb[0].mxu0
    %v1124 = vadd.f32 0.0, %v1123
    %v1125 = vpop.f32.mrb[0].mxu0
    %v1126 = vpop.f32.mrb[0].mxu0
    %v1127 = vpop.f32.mrb[0].mxu0
    %1128 = vdwg.mxu0
    %1130 = vrot.lane.b32.xlu0 %v1124, 16
    %v1131 = vpop.permute.xlu0 %1130
    %1133 = vst.msk [vmem:[#allocation11 + $0x8] sm:$0xff] %vm671, %v1131
    %1134 = vrot.lane.b32.xlu0 %v790, 104
    %v1135 = vpop.permute.xlu0 %1134
    %1136 = vrot.lane.b32.xlu0 %v791, 104
    %v1137 = vpop.permute.xlu0 %1136
    %v1139 = vsel %vm328, %v1135, 0
    %v1142 = vsel %vm328, %v1137, 0
    %1144 = vmatprep.subr.bf16.mxu0 0
    %1145 = vmatpush1.bf16.xpose.msra.mxu0 %v1142
    %1146 = vmatprep.subr.bf16.mxu0 0
    %1147 = vmatpush1.bf16.xpose.msra.mxu0 0
    %1148 = vmatprep.subr.bf16.mxu0 0
    %1149 = vmatpush1.bf16.xpose.msra.mxu0 0
    %1150 = vmatprep.subr.bf16.mxu0 0
    %1151 = vmatpush1.bf16.xpose.msra.mxu0 0
    %1152 = vmatprep.subr.bf16.mxu0 0
    %1153 = vmatpush1.bf16.xpose.msra.mxu0 0
    %1154 = vmatprep.subr.bf16.mxu0 0
    %1155 = vmatpush1.bf16.xpose.msra.mxu0 0
    %1156 = vmatprep.subr.bf16.mxu0 0
    %1157 = vmatpush1.bf16.xpose.msra.mxu0 0
    %1158 = vmatprep.subr.bf16.mxu0 0
    %1159 = vmatpush1.bf16.xpose.msra.mxu0 0
    %1160 = vmatprep.subr.bf16.mxu0 0
    %1161 = vmatpush1.bf16.xpose.msra.mxu0 0
    %1162 = vmatprep.subr.bf16.mxu0 0
    %1163 = vmatpush1.bf16.xpose.msra.mxu0 0
    %1164 = vmatprep.subr.bf16.mxu0 0
    %1165 = vmatpush1.bf16.xpose.msra.mxu0 0
    %1166 = vmatprep.subr.bf16.mxu0 0
    %1167 = vmatpush1.bf16.xpose.msra.mxu0 0
    %1168 = vmatprep.subr.bf16.mxu0 0
    %1169 = vmatpush1.bf16.xpose.msra.mxu0 0
    %1170 = vmatprep.subr.bf16.mxu0 0
    %1171 = vmatpush1.bf16.xpose.msra.mxu0 0
    %1172 = vmatprep.subr.bf16.mxu0 0
    %1173 = vmatpush1.bf16.xpose.msra.mxu0 0
    %1174 = vmatprep.subr.bf16.mxu0 0
    %1175 = vmatpush1.bf16.xpose.msra.mxu0 0
    %1176 = vmatprep.mubr.bf16.mxu0 0
    %1177 = vmatmul.mubr.bf16.gmra.mrb[0].mxu0 %v1139
    %v1178 = vpop.f32.mrb[0].mxu0
    %v1179 = vadd.f32 0.0, %v1178
    %v1180 = vpop.f32.mrb[0].mxu0
    %v1181 = vpop.f32.mrb[0].mxu0
    %v1182 = vpop.f32.mrb[0].mxu0
    %1183 = vdwg.mxu0
    %v1184 = vmul.f32 %v1179, 0.35355338
    %v1185 = vsel %vm328, %v1184, -inf
    %1186 = vmax.xlane.f32.xlu0 %v1185
    %v1187 = vpop.xlane.xlu0 %1186
    %v1188 = vsub.f32 %v1184, %v1187
    %v1189 = vmul.f32 %v1188, 1.442695
    %v1190 = vpow.pop %v1189
    %v1191 = vsel %vm328, %v1190, 0.0
    %1192 = vadd.xlane.f32.xlu0 %v1191
    %v1193 = vpop.xlane.xlu0 %1192
    %v1194 = vrcp.pop %v1193
    %v1195 = vmul.f32 %v1190, %v1194
    %v1196 = vpack.c.bf16 %v1195, %v1195
    %1197 = vrot.lane.b32.xlu0 %v792, 104
    %v1198 = vpop.permute.xlu0 %1197
    %v1200 = vsel %vm328, %v1196, 0
    %v1203 = vsel %vm391, %v1198, 0
    %1205 = vmatprep.subr.bf16.mxu0 0
    %1206 = vmatpush1.bf16.msra.mxu0 %v1203
    %1207 = vmatprep.subr.bf16.mxu0 0
    %1208 = vmatpush1.bf16.msra.mxu0 0
    %1209 = vmatprep.subr.bf16.mxu0 0
    %1210 = vmatpush1.bf16.msra.mxu0 0
    %1211 = vmatprep.subr.bf16.mxu0 0
    %1212 = vmatpush1.bf16.msra.mxu0 0
    %1213 = vmatprep.subr.bf16.mxu0 0
    %1214 = vmatpush1.bf16.msra.mxu0 0
    %1215 = vmatprep.subr.bf16.mxu0 0
    %1216 = vmatpush1.bf16.msra.mxu0 0
    %1217 = vmatprep.subr.bf16.mxu0 0
    %1218 = vmatpush1.bf16.msra.mxu0 0
    %1219 = vmatprep.subr.bf16.mxu0 0
    %1220 = vmatpush1.bf16.msra.mxu0 0
    %1221 = vmatprep.subr.bf16.mxu0 0
    %1222 = vmatpush1.bf16.msra.mxu0 0
    %1223 = vmatprep.subr.bf16.mxu0 0
    %1224 = vmatpush1.bf16.msra.mxu0 0
    %1225 = vmatprep.subr.bf16.mxu0 0
    %1226 = vmatpush1.bf16.msra.mxu0 0
    %1227 = vmatprep.subr.bf16.mxu0 0
    %1228 = vmatpush1.bf16.msra.mxu0 0
    %1229 = vmatprep.subr.bf16.mxu0 0
    %1230 = vmatpush1.bf16.msra.mxu0 0
    %1231 = vmatprep.subr.bf16.mxu0 0
    %1232 = vmatpush1.bf16.msra.mxu0 0
    %1233 = vmatprep.subr.bf16.mxu0 0
    %1234 = vmatpush1.bf16.msra.mxu0 0
    %1235 = vmatprep.subr.bf16.mxu0 0
    %1236 = vmatpush1.bf16.msra.mxu0 0
    %1237 = vmatprep.mubr.bf16.mxu0 0
    %1238 = vmatmul.mubr.bf16.gmra.mrb[0].mxu0 %v1200
    %v1239 = vpop.f32.mrb[0].mxu0
    %v1240 = vadd.f32 0.0, %v1239
    %v1241 = vpop.f32.mrb[0].mxu0
    %v1242 = vpop.f32.mrb[0].mxu0
    %v1243 = vpop.f32.mrb[0].mxu0
    %1244 = vdwg.mxu0
    %1246 = vrot.lane.b32.xlu0 %v1240, 24
    %v1247 = vpop.permute.xlu0 %1246
    %1249 = vst.msk [vmem:[#allocation11 + $0x8] sm:$0xff] %vm788, %v1247
    // Predicated region
    $region58: #{tpu_custom_call.1} parent=1 // pred_check
      _
    $region59: #{tpu_custom_call.1} parent=1 // pred_check_branch
      %1251 = sbr.rel (0) target = $region61
    $region60: #{tpu_custom_call.1} parent=1 // pred_region
      %s1253 = ssub.s32 256, 256
      %1254 = vsyncadd [#allocation4], %s1253
      %s1255 = sshll.u32 [#allocation11], 4
      %s1256 = int_to_ptr.vmem [resolvable:$true] %s1255
      %1261 = dma.vmem_to_hbm [thread:$0]  %s1256, 256, %s9, [#allocation4], 128, 128, 8
    $region61: #{tpu_custom_call.1} parent=1 // pred_fallthru
      _
    // Predicated region
    $region62: #{tpu_custom_call.1} parent=1 // pred_check
      _
    $region63: #{tpu_custom_call.1} parent=1 // pred_check_branch
      %1263 = sbr.rel (0) target = $region65
    $region64: #{tpu_custom_call.1} parent=1 // pred_region
      %1264 = dma.done [#allocation4], 256
    $region65: #{tpu_custom_call.1} parent=1 // pred_fallthru
      _
    %1265 = vsyncpa [#allocation3], 1
    %1266 = vsyncpa [#allocation6], 1
    %1267 = vsyncpa [#allocation9], 1
    %1268 = vsyncpa [#allocation4], 1

</llo_original>
